<compile_context>
chip_gen: v5e
topology: v5e:2x2
jax: 0.10.0
libtpu: 0.0.40
codegen_flags: <defaults>
</compile_context>

<pallas_src>
import jax
import jax.numpy as jnp
from jax.experimental import pallas as pl
from jax.experimental.pallas import tpu as pltpu


# ----------------------------------------------------------------------------
# helpers
# ----------------------------------------------------------------------------
def _round_up(x, m):
    return ((x + m - 1) // m) * m


def _gelu_tanh_f32(x):
    # F.gelu(x, approximate='tanh'), computed in float32.
    c = jnp.float32(0.7978845608028654)  # sqrt(2/pi)
    return 0.5 * x * (1.0 + jnp.tanh(c * (x + 0.044715 * x * x * x)))


def _pick_tm(T):
    """Token tile size: prefer large tiles, but keep >=2 tiles for v7x's two
    TensorCores and bound padding waste (avoid T=257 -> 512 blowups)."""
    T8 = _round_up(T, 8)
    if T8 <= 8:
        return T8, T8
    cands = [tm for tm in (256, 128, 64, 32, 16, 8) if 2 * tm <= T8]
    if not cands:
        cands = [8]
    for tm in cands:  # largest tile with small padding waste
        if _round_up(T8, tm) - T8 <= max(T8 // 8, 8):
            return tm, _round_up(T8, tm)
    tm = min(cands, key=lambda t: (_round_up(T8, t), -t))
    return tm, _round_up(T8, tm)


def _pick_tn(V_pad):
    for tn in (512, 256, 128):
        if V_pad % tn == 0 and tn <= V_pad:
            return tn
    return V_pad


# ----------------------------------------------------------------------------
# Kernels
# ----------------------------------------------------------------------------
def fused_blocks_ln_kernel(x_ref, w1_ref, b1_ref, w2_ref, b2_ref,
                           g_ref, beta_ref, o_ref):
    """All residual MLP blocks (unrolled over the static depth) + LayerNorm.

    Weight stacks arrive as the FULL (depth, ...) blocks (constant index_map)
    so they are DMA'd into VMEM once and stay resident across token tiles.
    The residual stream is carried in f32 values across the unrolled loop.
    """
    depth = w1_ref.shape[0]
    x = x_ref[...].astype(jnp.float32)                          # (tm, D) f32
    for d in range(depth):                                      # static unroll
        h = jnp.dot(x.astype(jnp.bfloat16), w1_ref[d],
                    preferred_element_type=jnp.float32) + b1_ref[d]   # (tm, 4D)
        h = _gelu_tanh_f32(h)
        y = jnp.dot(h.astype(jnp.bfloat16), w2_ref[d],
                    preferred_element_type=jnp.float32) + b2_ref[d]   # (tm, D)
        x = x + y
    # final LayerNorm (f32 math)
    mean = jnp.mean(x, axis=-1, keepdims=True)
    var = jnp.mean((x - mean) ** 2, axis=-1, keepdims=True)
    yn = (x - mean) * jax.lax.rsqrt(var + jnp.float32(1e-5))
    o_ref[...] = (yn * g_ref[...] + beta_ref[...]).astype(o_ref.dtype)


def head_kernel(x_ref, w_ref, o_ref):
    o_ref[...] = jnp.dot(
        x_ref[...], w_ref[...], preferred_element_type=jnp.float32
    ).astype(o_ref.dtype)


# ----------------------------------------------------------------------------
# Pallas wrappers
# ----------------------------------------------------------------------------
def fused_blocks_ln(x, w1s, b1s, w2s, b2s, gamma, beta, *, tm):
    T, D = x.shape
    depth, _, H = w1s.shape
    assert T % tm == 0

    # Resident-weight-stack budget check (bf16): at dim=128/depth=4 this is
    # ~1 MiB.  TODO(synk): K-tile weights + f32 accumulator when this does not
    # fit VMEM (v7x 64 MiB / v5e 16 MiB scoped) at large dims.
    resident_bytes = 2 * depth * D * H * 2 * 2  # w1+w2, bf16, x2 double-buffer
    vmem_limit = min(128 << 20, max(32 << 20, 2 * resident_bytes))

    return pl.pallas_call(
        fused_blocks_ln_kernel,
        out_shape=jax.ShapeDtypeStruct((T, D), jnp.bfloat16),
        grid=(T // tm,),
        in_specs=[
            pl.BlockSpec((tm, D), lambda i: (i, 0)),
            # Full weight / bias stacks, constant block index -> DMA'd once,
            # resident across all token tiles.
            pl.BlockSpec((depth, D, H), lambda i: (0, 0, 0)),
            pl.BlockSpec((depth, 1, H), lambda i: (0, 0, 0)),
            pl.BlockSpec((depth, H, D), lambda i: (0, 0, 0)),
            pl.BlockSpec((depth, 1, D), lambda i: (0, 0, 0)),
            pl.BlockSpec((1, D), lambda i: (0, 0)),
            pl.BlockSpec((1, D), lambda i: (0, 0)),
        ],
        out_specs=pl.BlockSpec((tm, D), lambda i: (i, 0)),
        compiler_params=pltpu.CompilerParams(
            dimension_semantics=("parallel",),
            vmem_limit_bytes=vmem_limit),
    )(x, w1s, b1s, w2s, b2s, gamma, beta)


def head_matmul(x, w, *, tm, tn):
    T, D = x.shape
    V = w.shape[1]
    assert T % tm == 0 and V % tn == 0
    return pl.pallas_call(
        head_kernel,
        out_shape=jax.ShapeDtypeStruct((T, V), jnp.float32),
        grid=(T // tm, V // tn),
        in_specs=[
            pl.BlockSpec((tm, D), lambda i, j: (i, 0)),
            pl.BlockSpec((D, tn), lambda i, j: (0, j)),
        ],
        out_specs=pl.BlockSpec((tm, tn), lambda i, j: (i, j)),
        compiler_params=pltpu.CompilerParams(
            dimension_semantics=("parallel", "parallel")),
    )(x, w)


# ----------------------------------------------------------------------------
# Model (parameters + forward)
# ----------------------------------------------------------------------------
def init_params(key, vocab, dim, depth):
    keys = jax.random.split(key, 2 + depth)
    scale = 0.02
    w1s, b1s, w2s, b2s = [], [], [], []
    for d in range(depth):
        k1, k2 = jax.random.split(keys[2 + d])
        w1s.append(scale * jax.random.normal(k1, (dim, 4 * dim), jnp.float32))
        b1s.append(jnp.zeros((1, 4 * dim), jnp.float32))
        w2s.append(scale * jax.random.normal(k2, (4 * dim, dim), jnp.float32))
        b2s.append(jnp.zeros((1, dim), jnp.float32))

    head_w = (scale * jax.random.normal(keys[1], (dim, vocab), jnp.float32)
              ).astype(jnp.bfloat16)
    # Pre-pad the head weight to a lane-dense vocab multiple ONCE (not per call).
    V_pad = _round_up(vocab, 128)
    if V_pad != vocab:
        head_w = jnp.pad(head_w, ((0, 0), (0, V_pad - vocab)))

    return {
        # bf16 storage, f32 accumulation inside the kernels.
        # TODO(synk): validate vs fp32 torch reference with explicit rtol/atol.
        "embed": (scale * jax.random.normal(keys[0], (vocab, dim),
                                            jnp.float32)).astype(jnp.bfloat16),
        "head_w": head_w,                             # (D, V_pad) bf16
        "ln_g": jnp.ones((1, dim), jnp.float32),
        "ln_b": jnp.zeros((1, dim), jnp.float32),
        "w1": jnp.stack(w1s).astype(jnp.bfloat16),    # (depth, D, 4D)
        "b1": jnp.stack(b1s),                         # (depth, 1, 4D) f32
        "w2": jnp.stack(w2s).astype(jnp.bfloat16),    # (depth, 4D, D)
        "b2": jnp.stack(b2s),                         # (depth, 1, D)  f32
    }


@jax.jit
def mymlp_forward(params, tokens):
    B, S = tokens.shape
    T = B * S
    V = params["embed"].shape[0]
    V_pad = params["head_w"].shape[1]

    # Token tiling: >=2 "parallel" tiles when possible (v7x 2 TCs), bounded pad.
    tm, T_pad = _pick_tm(T)
    # Vocab tiling: lane-dense (>=128) output tiles.
    tn = _pick_tn(V_pad)

    # Embedding gather kept as JAX glue (pure gather, no arithmetic hot path).
    x = jnp.take(params["embed"], tokens.reshape(-1), axis=0)   # (T, D) bf16
    if T_pad != T:
        x = jnp.pad(x, ((0, T_pad - T), (0, 0)))

    x = fused_blocks_ln(x, params["w1"], params["b1"],
                        params["w2"], params["b2"],
                        params["ln_g"], params["ln_b"], tm=tm)  # (T_pad, D) bf16

    logits = head_matmul(x, params["head_w"], tm=tm, tn=tn)     # (T_pad, V_pad) f32
    return logits[:T, :V].reshape(B, S, V)


# ----------------------------------------------------------------------------
# Main
# ----------------------------------------------------------------------------
if __name__ == "__main__":
    # Small shapes consistent with MyMLP(vocab, dim, depth); (B, S) int token ids.
    vocab, dim, depth = 256, 128, 4
    batch, seq = 2, 8

    key = jax.random.PRNGKey(0)
    pkey, tkey = jax.random.split(key)
    params = init_params(pkey, vocab, dim, depth)
    tokens = jax.random.randint(tkey, (batch, seq), 0, vocab, dtype=jnp.int32)

    logits = mymlp_forward(params, tokens)
    jax.block_until_ready(logits)
    assert logits.shape == (batch, seq, vocab), logits.shape
    assert bool(jnp.all(jnp.isfinite(logits)))
    print("KERNEL_OK")
</pallas_src>

<mosaic_0001>
module attributes {stable_mosaic.version = 11 : i64} {
  func.func @head_kernel(%arg0: i32, %arg1: i32, %arg2: memref<8x128xbf16, #tpu.memory_space<vmem>>, %arg3: memref<128x256xbf16, #tpu.memory_space<vmem>>, %arg4: memref<8x256xf32, #tpu.memory_space<vmem>>) attributes {dimension_semantics = [#tpu.dimension_semantics<parallel>, #tpu.dimension_semantics<parallel>], iteration_bounds = array<i64: 2, 1>, scalar_prefetch = 0 : i64, scratch_operands = 0 : i64, tpu.core_type = #tpu.core_type<tc>, window_params = [{transform_indices = @transform_0, window_bounds = array<i64: 8, 128>}, {transform_indices = @transform_1, window_bounds = array<i64: 128, 256>}, {transform_indices = @transform_2, window_bounds = array<i64: 8, 256>}]} {
    %c0 = arith.constant 0 : index
    %c0_0 = arith.constant 0 : index
    %0 = vector.load %arg2[%c0, %c0_0] : memref<8x128xbf16, #tpu.memory_space<vmem>>, vector<8x128xbf16>
    %c0_1 = arith.constant 0 : index
    %c0_2 = arith.constant 0 : index
    %1 = vector.load %arg3[%c0_1, %c0_2] : memref<128x256xbf16, #tpu.memory_space<vmem>>, vector<128x256xbf16>
    %cst = arith.constant dense<0.000000e+00> : vector<8x256xf32>
    %2 = tpu.matmul %0, %1, %cst {dimension_numbers = #tpu.dot_dimension_numbers<[1], [0], [0], [1], [0, 0, 1, 1], [], []>} : vector<8x128xbf16>, vector<128x256xbf16>, vector<8x256xf32> -> vector<8x256xf32>
    %c0_3 = arith.constant 0 : index
    %c0_4 = arith.constant 0 : index
    %3 = vector.load %arg4[%c0_3, %c0_4] : memref<8x256xf32, #tpu.memory_space<vmem>>, vector<8x256xf32>
    tpu.vector_store %arg4[%c0_3, %c0_4], %2 {strides = array<i32>} : memref<8x256xf32, #tpu.memory_space<vmem>>, vector<8x256xf32>,
    return
  }
  func.func @transform_0(%arg0: i32, %arg1: i32) -> (i32, i32) {
    %c0_i32 = arith.constant 0 : i32
    %c0_i32_0 = arith.constant 0 : i32
    return %arg0, %c0_i32 : i32, i32
  }
  func.func @transform_1(%arg0: i32, %arg1: i32) -> (i32, i32) {
    %c0_i32 = arith.constant 0 : i32
    %c0_i32_0 = arith.constant 0 : i32
    return %c0_i32, %arg1 : i32, i32
  }
  func.func @transform_2(%arg0: i32, %arg1: i32) -> (i32, i32) {
    %c0_i32 = arith.constant 0 : i32
    return %arg0, %arg1 : i32, i32
  }
}

module attributes {stable_mosaic.version = 11 : i64} {
  func.func @fused_blocks_ln_kernel(%arg0: i32, %arg1: memref<8x128xbf16, #tpu.memory_space<vmem>>, %arg2: memref<4x128x512xbf16, #tpu.memory_space<vmem>>, %arg3: memref<4x1x512xf32, #tpu.memory_space<vmem>>, %arg4: memref<4x512x128xbf16, #tpu.memory_space<vmem>>, %arg5: memref<4x1x128xf32, #tpu.memory_space<vmem>>, %arg6: memref<1x128xf32, #tpu.memory_space<vmem>>, %arg7: memref<1x128xf32, #tpu.memory_space<vmem>>, %arg8: memref<8x128xbf16, #tpu.memory_space<vmem>>) attributes {dimension_semantics = [#tpu.dimension_semantics<parallel>], iteration_bounds = array<i64: 2>, scalar_prefetch = 0 : i64, scratch_operands = 0 : i64, tpu.core_type = #tpu.core_type<tc>, window_params = [{transform_indices = @transform_0, window_bounds = array<i64: 8, 128>}, {pipeline_mode = #tpu.pipeline_mode<synchronous>, transform_indices = @transform_1, window_bounds = array<i64: 4, 128, 512>}, {pipeline_mode = #tpu.pipeline_mode<synchronous>, transform_indices = @transform_2, window_bounds = array<i64: 4, 1, 512>}, {pipeline_mode = #tpu.pipeline_mode<synchronous>, transform_indices = @transform_3, window_bounds = array<i64: 4, 512, 128>}, {pipeline_mode = #tpu.pipeline_mode<synchronous>, transform_indices = @transform_4, window_bounds = array<i64: 4, 1, 128>}, {pipeline_mode = #tpu.pipeline_mode<synchronous>, transform_indices = @transform_5, window_bounds = array<i64: 1, 128>}, {pipeline_mode = #tpu.pipeline_mode<synchronous>, transform_indices = @transform_6, window_bounds = array<i64: 1, 128>}, {transform_indices = @transform_7, window_bounds = array<i64: 8, 128>}]} {
    %c0 = arith.constant 0 : index
    %c0_0 = arith.constant 0 : index
    %0 = vector.load %arg1[%c0, %c0_0] : memref<8x128xbf16, #tpu.memory_space<vmem>>, vector<8x128xbf16>
    %1 = arith.extf %0 : vector<8x128xbf16> to vector<8x128xf32>
    %2 = arith.truncf %1 : vector<8x128xf32> to vector<8x128xbf16>
    %c0_1 = arith.constant 0 : index
    %c0_2 = arith.constant 0 : index
    %c0_3 = arith.constant 0 : index
    %3 = vector.load %arg2[%c0_1, %c0_2, %c0_3] : memref<4x128x512xbf16, #tpu.memory_space<vmem>>, vector<1x128x512xbf16>
    %4 = vector.shape_cast %3 : vector<1x128x512xbf16> to vector<128x512xbf16>
    %cst = arith.constant dense<0.000000e+00> : vector<8x512xf32>
    %5 = tpu.matmul %2, %4, %cst {dimension_numbers = #tpu.dot_dimension_numbers<[1], [0], [0], [1], [0, 0, 1, 1], [], []>} : vector<8x128xbf16>, vector<128x512xbf16>, vector<8x512xf32> -> vector<8x512xf32>
    %c0_4 = arith.constant 0 : index
    %c0_5 = arith.constant 0 : index
    %c0_6 = arith.constant 0 : index
    %6 = vector.load %arg3[%c0_4, %c0_5, %c0_6] : memref<4x1x512xf32, #tpu.memory_space<vmem>>, vector<1x1x512xf32>
    %7 = vector.shape_cast %6 : vector<1x1x512xf32> to vector<1x512xf32>
    %8 = vector.broadcast %7 : vector<1x512xf32> to vector<8x512xf32>
    %9 = arith.addf %5, %8 : vector<8x512xf32>
    %cst_7 = arith.constant 5.000000e-01 : f32
    %10 = vector.broadcast %cst_7 : f32 to vector<8x512xf32>
    %11 = arith.mulf %10, %9 : vector<8x512xf32>
    %cst_8 = arith.constant 4.471500e-02 : f32
    %12 = vector.broadcast %cst_8 : f32 to vector<8x512xf32>
    %13 = arith.mulf %12, %9 : vector<8x512xf32>
    %14 = arith.mulf %13, %9 : vector<8x512xf32>
    %15 = arith.mulf %14, %9 : vector<8x512xf32>
    %16 = arith.addf %9, %15 : vector<8x512xf32>
    %cst_9 = arith.constant 0.797884583 : f32
    %17 = vector.broadcast %cst_9 : f32 to vector<8x512xf32>
    %18 = arith.mulf %17, %16 : vector<8x512xf32>
    %19 = math.tanh %18 : vector<8x512xf32>
    %cst_10 = arith.constant 1.000000e+00 : f32
    %20 = vector.broadcast %cst_10 : f32 to vector<8x512xf32>
    %21 = arith.addf %20, %19 : vector<8x512xf32>
    %22 = arith.mulf %11, %21 : vector<8x512xf32>
    %23 = arith.truncf %22 : vector<8x512xf32> to vector<8x512xbf16>
    %c0_11 = arith.constant 0 : index
    %c0_12 = arith.constant 0 : index
    %c0_13 = arith.constant 0 : index
    %24 = vector.load %arg4[%c0_11, %c0_12, %c0_13] : memref<4x512x128xbf16, #tpu.memory_space<vmem>>, vector<1x512x128xbf16>
    %25 = vector.shape_cast %24 : vector<1x512x128xbf16> to vector<512x128xbf16>
    %cst_14 = arith.constant dense<0.000000e+00> : vector<8x128xf32>
    %26 = tpu.matmul %23, %25, %cst_14 {dimension_numbers = #tpu.dot_dimension_numbers<[1], [0], [0], [1], [0, 0, 1, 1], [], []>} : vector<8x512xbf16>, vector<512x128xbf16>, vector<8x128xf32> -> vector<8x128xf32>
    %c0_15 = arith.constant 0 : index
    %c0_16 = arith.constant 0 : index
    %c0_17 = arith.constant 0 : index
    %27 = vector.load %arg5[%c0_15, %c0_16, %c0_17] : memref<4x1x128xf32, #tpu.memory_space<vmem>>, vector<1x1x128xf32>
    %28 = vector.shape_cast %27 : vector<1x1x128xf32> to vector<1x128xf32>
    %29 = vector.broadcast %28 : vector<1x128xf32> to vector<8x128xf32>
    %30 = arith.addf %26, %29 : vector<8x128xf32>
    %31 = arith.addf %1, %30 : vector<8x128xf32>
    %32 = arith.truncf %31 : vector<8x128xf32> to vector<8x128xbf16>
    %c1 = arith.constant 1 : index
    %c0_18 = arith.constant 0 : index
    %c0_19 = arith.constant 0 : index
    %33 = vector.load %arg2[%c1, %c0_18, %c0_19] : memref<4x128x512xbf16, #tpu.memory_space<vmem>>, vector<1x128x512xbf16>
    %34 = vector.shape_cast %33 : vector<1x128x512xbf16> to vector<128x512xbf16>
    %cst_20 = arith.constant dense<0.000000e+00> : vector<8x512xf32>
    %35 = tpu.matmul %32, %34, %cst_20 {dimension_numbers = #tpu.dot_dimension_numbers<[1], [0], [0], [1], [0, 0, 1, 1], [], []>} : vector<8x128xbf16>, vector<128x512xbf16>, vector<8x512xf32> -> vector<8x512xf32>
    %c1_21 = arith.constant 1 : index
    %c0_22 = arith.constant 0 : index
    %c0_23 = arith.constant 0 : index
    %36 = vector.load %arg3[%c1_21, %c0_22, %c0_23] : memref<4x1x512xf32, #tpu.memory_space<vmem>>, vector<1x1x512xf32>
    %37 = vector.shape_cast %36 : vector<1x1x512xf32> to vector<1x512xf32>
    %38 = vector.broadcast %37 : vector<1x512xf32> to vector<8x512xf32>
    %39 = arith.addf %35, %38 : vector<8x512xf32>
    %cst_24 = arith.constant 5.000000e-01 : f32
    %40 = vector.broadcast %cst_24 : f32 to vector<8x512xf32>
    %41 = arith.mulf %40, %39 : vector<8x512xf32>
    %cst_25 = arith.constant 4.471500e-02 : f32
    %42 = vector.broadcast %cst_25 : f32 to vector<8x512xf32>
    %43 = arith.mulf %42, %39 : vector<8x512xf32>
    %44 = arith.mulf %43, %39 : vector<8x512xf32>
    %45 = arith.mulf %44, %39 : vector<8x512xf32>
    %46 = arith.addf %39, %45 : vector<8x512xf32>
    %cst_26 = arith.constant 0.797884583 : f32
    %47 = vector.broadcast %cst_26 : f32 to vector<8x512xf32>
    %48 = arith.mulf %47, %46 : vector<8x512xf32>
    %49 = math.tanh %48 : vector<8x512xf32>
    %cst_27 = arith.constant 1.000000e+00 : f32
    %50 = vector.broadcast %cst_27 : f32 to vector<8x512xf32>
    %51 = arith.addf %50, %49 : vector<8x512xf32>
    %52 = arith.mulf %41, %51 : vector<8x512xf32>
    %53 = arith.truncf %52 : vector<8x512xf32> to vector<8x512xbf16>
    %c1_28 = arith.constant 1 : index
    %c0_29 = arith.constant 0 : index
    %c0_30 = arith.constant 0 : index
    %54 = vector.load %arg4[%c1_28, %c0_29, %c0_30] : memref<4x512x128xbf16, #tpu.memory_space<vmem>>, vector<1x512x128xbf16>
    %55 = vector.shape_cast %54 : vector<1x512x128xbf16> to vector<512x128xbf16>
    %cst_31 = arith.constant dense<0.000000e+00> : vector<8x128xf32>
    %56 = tpu.matmul %53, %55, %cst_31 {dimension_numbers = #tpu.dot_dimension_numbers<[1], [0], [0], [1], [0, 0, 1, 1], [], []>} : vector<8x512xbf16>, vector<512x128xbf16>, vector<8x128xf32> -> vector<8x128xf32>
    %c1_32 = arith.constant 1 : index
    %c0_33 = arith.constant 0 : index
    %c0_34 = arith.constant 0 : index
    %57 = vector.load %arg5[%c1_32, %c0_33, %c0_34] : memref<4x1x128xf32, #tpu.memory_space<vmem>>, vector<1x1x128xf32>
    %58 = vector.shape_cast %57 : vector<1x1x128xf32> to vector<1x128xf32>
    %59 = vector.broadcast %58 : vector<1x128xf32> to vector<8x128xf32>
    %60 = arith.addf %56, %59 : vector<8x128xf32>
    %61 = arith.addf %31, %60 : vector<8x128xf32>
    %62 = arith.truncf %61 : vector<8x128xf32> to vector<8x128xbf16>
    %c2 = arith.constant 2 : index
    %c0_35 = arith.constant 0 : index
    %c0_36 = arith.constant 0 : index
    %63 = vector.load %arg2[%c2, %c0_35, %c0_36] : memref<4x128x512xbf16, #tpu.memory_space<vmem>>, vector<1x128x512xbf16>
    %64 = vector.shape_cast %63 : vector<1x128x512xbf16> to vector<128x512xbf16>
    %cst_37 = arith.constant dense<0.000000e+00> : vector<8x512xf32>
    %65 = tpu.matmul %62, %64, %cst_37 {dimension_numbers = #tpu.dot_dimension_numbers<[1], [0], [0], [1], [0, 0, 1, 1], [], []>} : vector<8x128xbf16>, vector<128x512xbf16>, vector<8x512xf32> -> vector<8x512xf32>
    %c2_38 = arith.constant 2 : index
    %c0_39 = arith.constant 0 : index
    %c0_40 = arith.constant 0 : index
    %66 = vector.load %arg3[%c2_38, %c0_39, %c0_40] : memref<4x1x512xf32, #tpu.memory_space<vmem>>, vector<1x1x512xf32>
    %67 = vector.shape_cast %66 : vector<1x1x512xf32> to vector<1x512xf32>
    %68 = vector.broadcast %67 : vector<1x512xf32> to vector<8x512xf32>
    %69 = arith.addf %65, %68 : vector<8x512xf32>
    %cst_41 = arith.constant 5.000000e-01 : f32
    %70 = vector.broadcast %cst_41 : f32 to vector<8x512xf32>
    %71 = arith.mulf %70, %69 : vector<8x512xf32>
    %cst_42 = arith.constant 4.471500e-02 : f32
    %72 = vector.broadcast %cst_42 : f32 to vector<8x512xf32>
    %73 = arith.mulf %72, %69 : vector<8x512xf32>
    %74 = arith.mulf %73, %69 : vector<8x512xf32>
    %75 = arith.mulf %74, %69 : vector<8x512xf32>
    %76 = arith.addf %69, %75 : vector<8x512xf32>
    %cst_43 = arith.constant 0.797884583 : f32
    %77 = vector.broadcast %cst_43 : f32 to vector<8x512xf32>
    %78 = arith.mulf %77, %76 : vector<8x512xf32>
    %79 = math.tanh %78 : vector<8x512xf32>
    %cst_44 = arith.constant 1.000000e+00 : f32
    %80 = vector.broadcast %cst_44 : f32 to vector<8x512xf32>
    %81 = arith.addf %80, %79 : vector<8x512xf32>
    %82 = arith.mulf %71, %81 : vector<8x512xf32>
    %83 = arith.truncf %82 : vector<8x512xf32> to vector<8x512xbf16>
    %c2_45 = arith.constant 2 : index
    %c0_46 = arith.constant 0 : index
    %c0_47 = arith.constant 0 : index
    %84 = vector.load %arg4[%c2_45, %c0_46, %c0_47] : memref<4x512x128xbf16, #tpu.memory_space<vmem>>, vector<1x512x128xbf16>
    %85 = vector.shape_cast %84 : vector<1x512x128xbf16> to vector<512x128xbf16>
    %cst_48 = arith.constant dense<0.000000e+00> : vector<8x128xf32>
    %86 = tpu.matmul %83, %85, %cst_48 {dimension_numbers = #tpu.dot_dimension_numbers<[1], [0], [0], [1], [0, 0, 1, 1], [], []>} : vector<8x512xbf16>, vector<512x128xbf16>, vector<8x128xf32> -> vector<8x128xf32>
    %c2_49 = arith.constant 2 : index
    %c0_50 = arith.constant 0 : index
    %c0_51 = arith.constant 0 : index
    %87 = vector.load %arg5[%c2_49, %c0_50, %c0_51] : memref<4x1x128xf32, #tpu.memory_space<vmem>>, vector<1x1x128xf32>
    %88 = vector.shape_cast %87 : vector<1x1x128xf32> to vector<1x128xf32>
    %89 = vector.broadcast %88 : vector<1x128xf32> to vector<8x128xf32>
    %90 = arith.addf %86, %89 : vector<8x128xf32>
    %91 = arith.addf %61, %90 : vector<8x128xf32>
    %92 = arith.truncf %91 : vector<8x128xf32> to vector<8x128xbf16>
    %c3 = arith.constant 3 : index
    %c0_52 = arith.constant 0 : index
    %c0_53 = arith.constant 0 : index
    %93 = vector.load %arg2[%c3, %c0_52, %c0_53] : memref<4x128x512xbf16, #tpu.memory_space<vmem>>, vector<1x128x512xbf16>
    %94 = vector.shape_cast %93 : vector<1x128x512xbf16> to vector<128x512xbf16>
    %cst_54 = arith.constant dense<0.000000e+00> : vector<8x512xf32>
    %95 = tpu.matmul %92, %94, %cst_54 {dimension_numbers = #tpu.dot_dimension_numbers<[1], [0], [0], [1], [0, 0, 1, 1], [], []>} : vector<8x128xbf16>, vector<128x512xbf16>, vector<8x512xf32> -> vector<8x512xf32>
    %c3_55 = arith.constant 3 : index
    %c0_56 = arith.constant 0 : index
    %c0_57 = arith.constant 0 : index
    %96 = vector.load %arg3[%c3_55, %c0_56, %c0_57] : memref<4x1x512xf32, #tpu.memory_space<vmem>>, vector<1x1x512xf32>
    %97 = vector.shape_cast %96 : vector<1x1x512xf32> to vector<1x512xf32>
    %98 = vector.broadcast %97 : vector<1x512xf32> to vector<8x512xf32>
    %99 = arith.addf %95, %98 : vector<8x512xf32>
    %cst_58 = arith.constant 5.000000e-01 : f32
    %100 = vector.broadcast %cst_58 : f32 to vector<8x512xf32>
    %101 = arith.mulf %100, %99 : vector<8x512xf32>
    %cst_59 = arith.constant 4.471500e-02 : f32
    %102 = vector.broadcast %cst_59 : f32 to vector<8x512xf32>
    %103 = arith.mulf %102, %99 : vector<8x512xf32>
    %104 = arith.mulf %103, %99 : vector<8x512xf32>
    %105 = arith.mulf %104, %99 : vector<8x512xf32>
    %106 = arith.addf %99, %105 : vector<8x512xf32>
    %cst_60 = arith.constant 0.797884583 : f32
    %107 = vector.broadcast %cst_60 : f32 to vector<8x512xf32>
    %108 = arith.mulf %107, %106 : vector<8x512xf32>
    %109 = math.tanh %108 : vector<8x512xf32>
    %cst_61 = arith.constant 1.000000e+00 : f32
    %110 = vector.broadcast %cst_61 : f32 to vector<8x512xf32>
    %111 = arith.addf %110, %109 : vector<8x512xf32>
    %112 = arith.mulf %101, %111 : vector<8x512xf32>
    %113 = arith.truncf %112 : vector<8x512xf32> to vector<8x512xbf16>
    %c3_62 = arith.constant 3 : index
    %c0_63 = arith.constant 0 : index
    %c0_64 = arith.constant 0 : index
    %114 = vector.load %arg4[%c3_62, %c0_63, %c0_64] : memref<4x512x128xbf16, #tpu.memory_space<vmem>>, vector<1x512x128xbf16>
    %115 = vector.shape_cast %114 : vector<1x512x128xbf16> to vector<512x128xbf16>
    %cst_65 = arith.constant dense<0.000000e+00> : vector<8x128xf32>
    %116 = tpu.matmul %113, %115, %cst_65 {dimension_numbers = #tpu.dot_dimension_numbers<[1], [0], [0], [1], [0, 0, 1, 1], [], []>} : vector<8x512xbf16>, vector<512x128xbf16>, vector<8x128xf32> -> vector<8x128xf32>
    %c3_66 = arith.constant 3 : index
    %c0_67 = arith.constant 0 : index
    %c0_68 = arith.constant 0 : index
    %117 = vector.load %arg5[%c3_66, %c0_67, %c0_68] : memref<4x1x128xf32, #tpu.memory_space<vmem>>, vector<1x1x128xf32>
    %118 = vector.shape_cast %117 : vector<1x1x128xf32> to vector<1x128xf32>
    %119 = vector.broadcast %118 : vector<1x128xf32> to vector<8x128xf32>
    %120 = arith.addf %116, %119 : vector<8x128xf32>
    %121 = arith.addf %91, %120 : vector<8x128xf32>
    %cst_69 = arith.constant dense<0.000000e+00> : vector<8xf32>
    %122 = vector.multi_reduction <add>, %121, %cst_69 [1] : vector<8x128xf32> to vector<8xf32>
    %123 = vector.shape_cast %122 : vector<8xf32> to vector<8x1xf32>
    %cst_70 = arith.constant 1.280000e+02 : f32
    %124 = vector.broadcast %cst_70 : f32 to vector<8x1xf32>
    %125 = arith.divf %123, %124 : vector<8x1xf32>
    %126 = vector.broadcast %125 : vector<8x1xf32> to vector<8x128xf32>
    %127 = arith.subf %121, %126 : vector<8x128xf32>
    %128 = arith.mulf %127, %127 : vector<8x128xf32>
    %cst_71 = arith.constant dense<0.000000e+00> : vector<8xf32>
    %129 = vector.multi_reduction <add>, %128, %cst_71 [1] : vector<8x128xf32> to vector<8xf32>
    %130 = vector.shape_cast %129 : vector<8xf32> to vector<8x1xf32>
    %cst_72 = arith.constant 1.280000e+02 : f32
    %131 = vector.broadcast %cst_72 : f32 to vector<8x1xf32>
    %132 = arith.divf %130, %131 : vector<8x1xf32>
    %133 = vector.broadcast %125 : vector<8x1xf32> to vector<8x128xf32>
    %134 = arith.subf %121, %133 : vector<8x128xf32>
    %cst_73 = arith.constant 9.99999974E-6 : f32
    %135 = vector.broadcast %cst_73 : f32 to vector<8x1xf32>
    %136 = arith.addf %132, %135 : vector<8x1xf32>
    %137 = math.rsqrt %136 : vector<8x1xf32>
    %138 = vector.broadcast %137 : vector<8x1xf32> to vector<8x128xf32>
    %139 = arith.mulf %134, %138 : vector<8x128xf32>
    %c0_74 = arith.constant 0 : index
    %c0_75 = arith.constant 0 : index
    %140 = vector.load %arg6[%c0_74, %c0_75] : memref<1x128xf32, #tpu.memory_space<vmem>>, vector<1x128xf32>
    %141 = vector.broadcast %140 : vector<1x128xf32> to vector<8x128xf32>
    %142 = arith.mulf %139, %141 : vector<8x128xf32>
    %c0_76 = arith.constant 0 : index
    %c0_77 = arith.constant 0 : index
    %143 = vector.load %arg7[%c0_76, %c0_77] : memref<1x128xf32, #tpu.memory_space<vmem>>, vector<1x128xf32>
    %144 = vector.broadcast %143 : vector<1x128xf32> to vector<8x128xf32>
    %145 = arith.addf %142, %144 : vector<8x128xf32>
    %146 = arith.truncf %145 : vector<8x128xf32> to vector<8x128xbf16>
    %c0_78 = arith.constant 0 : index
    %c0_79 = arith.constant 0 : index
    %147 = vector.load %arg8[%c0_78, %c0_79] : memref<8x128xbf16, #tpu.memory_space<vmem>>, vector<8x128xbf16>
    tpu.vector_store %arg8[%c0_78, %c0_79], %146 {strides = array<i32>} : memref<8x128xbf16, #tpu.memory_space<vmem>>, vector<8x128xbf16>,
    return
  }
  func.func @transform_0(%arg0: i32) -> (i32, i32) {
    %c0_i32 = arith.constant 0 : i32
    %c0_i32_0 = arith.constant 0 : i32
    return %arg0, %c0_i32 : i32, i32
  }
  func.func @transform_1(%arg0: i32) -> (i32, i32, i32) {
    %c0_i32 = arith.constant 0 : i32
    %c0_i32_0 = arith.constant 0 : i32
    %c0_i32_1 = arith.constant 0 : i32
    %c0_i32_2 = arith.constant 0 : i32
    return %c0_i32, %c0_i32_0, %c0_i32_1 : i32, i32, i32
  }
  func.func @transform_2(%arg0: i32) -> (i32, i32, i32) {
    %c0_i32 = arith.constant 0 : i32
    %c0_i32_0 = arith.constant 0 : i32
    %c0_i32_1 = arith.constant 0 : i32
    %c0_i32_2 = arith.constant 0 : i32
    return %c0_i32, %c0_i32_0, %c0_i32_1 : i32, i32, i32
  }
  func.func @transform_3(%arg0: i32) -> (i32, i32, i32) {
    %c0_i32 = arith.constant 0 : i32
    %c0_i32_0 = arith.constant 0 : i32
    %c0_i32_1 = arith.constant 0 : i32
    %c0_i32_2 = arith.constant 0 : i32
    return %c0_i32, %c0_i32_0, %c0_i32_1 : i32, i32, i32
  }
  func.func @transform_4(%arg0: i32) -> (i32, i32, i32) {
    %c0_i32 = arith.constant 0 : i32
    %c0_i32_0 = arith.constant 0 : i32
    %c0_i32_1 = arith.constant 0 : i32
    %c0_i32_2 = arith.constant 0 : i32
    return %c0_i32, %c0_i32_0, %c0_i32_1 : i32, i32, i32
  }
  func.func @transform_5(%arg0: i32) -> (i32, i32) {
    %c0_i32 = arith.constant 0 : i32
    %c0_i32_0 = arith.constant 0 : i32
    %c0_i32_1 = arith.constant 0 : i32
    return %c0_i32, %c0_i32_0 : i32, i32
  }
  func.func @transform_6(%arg0: i32) -> (i32, i32) {
    %c0_i32 = arith.constant 0 : i32
    %c0_i32_0 = arith.constant 0 : i32
    %c0_i32_1 = arith.constant 0 : i32
    return %c0_i32, %c0_i32_0 : i32, i32
  }
  func.func @transform_7(%arg0: i32) -> (i32, i32) {
    %c0_i32 = arith.constant 0 : i32
    %c0_i32_0 = arith.constant 0 : i32
    return %arg0, %c0_i32 : i32, i32
  }
}

</mosaic_0001>

<llo_original>
// kernel: mymlp_forward.3
$region0: #{mymlp_forward.3}
  #allocation0 [shape = 'u32[]', space=smem, size = 0x4, offset = 0x4, fixed_abs, tag = 'smem constant byte address 0x4 - core index']
  #allocation1 [shape = 'u32[72,128]{1,0:T(1,128)}', space=vmem, size = 0x9000, scoped, tag = 'internal scratch']
  %s0 = inlined_call_operand.vmem [shape: bf16[16,128], index: 0, kind: input, shape index: {}]
  %s1 = inlined_call_operand.hbm [shape: bf16[128,256], index: 1, kind: input, shape index: {}]
  %s2 = inlined_call_operand.hbm [shape: f32[16,256], index: 2, kind: output, shape index: {}]
  %s3 = sld [smem:[#allocation0]]
  $region45: #{mymlp_forward.3} parent=0
    _
  %s5 = ssub.s32 1, %s3
  %s6 = scalar_select 0, %s5, %s3
  $region1: #{mymlp_forward.3} parent=0
    #allocation2 [shape = 'u8[65536]{0}', space=vmem, size = 0x10000, scoped, tag = 'input window, operand 1, single buffered']
    #allocation3 [shape = 's32[2]{0}', space=sflag, size = 0x8, scoped, tag = 'scoped memory for mymlp_forward.3']
    #allocation4 [shape = 's32[2]{0}', space=sflag, size = 0x8, scoped, tag = 'scoped memory for mymlp_forward.3']
    #allocation5 [shape = 'u8[16384]{0}', space=vmem, size = 0x4000, scoped, tag = 'output window, operand 0']
    %7 = vsyncpa [#allocation3], 0
    %8 = vsyncpa [#allocation4], 0
    %s9 = scalar_lea.sflag [#allocation4], 1
    %10 = vsyncpa %s9, 0
    loop: start=0, step=1, limit=4
    $region2: #{mymlp_forward.3} parent=1 // loop_pre_header
      _
    $region3: #{mymlp_forward.3} parent=1 // loop_header
      %s12 = sphi 0, %s16
      %p13 = scmp.ge.s32.totalorder %s12, 4
      %s19 = sphi 0, %s31
      %s20 = sphi 0, %s27
      %s21 = sphi 0, %s19
      %s22 = sphi 0, %s20
      %s23 = sphi 0, %s21
      %s24 = sphi 0, %s22
      %s34 = sphi 0, %s36
      %s37 = sphi 0, %s34
      %s38 = sphi 0, %s37
      %s54 = sphi 0, %s38
      %s60 = sphi 0, %s62
      %s63 = sphi 0, %s60
      %s64 = sphi 0, %s63
      %s80 = sphi 0, %s64
      %s88 = sphi 0, %s90
      %s91 = sphi 0, %s88
      %s92 = sphi 0, %s91
      %s108 = sphi 0, %s92
    $region4: #{mymlp_forward.3} parent=1 // loop_header_branch
      %15 = sbr.rel (%p13) target = $region8
    $region5: #{mymlp_forward.3} parent=1 // loop_body
      %s17 = ssub.s32 %s12, 1
      %s18 = ssub.s32 %s12, 2
      %s25 = sadd.s32 1, %s20
      %p26 = scmp.ge.s32.totalorder %s25, 1
      %s27 = scalar_select %p26, 0, %s25
      %s28 = sadd.s32 1, %s19
      %s29 = scalar_select %p26, %s28, %s19
      %p30 = scmp.ge.s32.totalorder %s29, 2
      %s31 = scalar_select %p30, 0, %s29
      %s32 = ssub.s32 %s19, %s31
      %p33 = scmp.eq.s32.totalorder %s32, 0
      %s35 = sadd.s32 %s34, 1
      %s36 = scalar_select %p33, %s34, %s35
      %p39 = pneg %p33
      %p40 = scmp.eq.s32.totalorder %s12, 1
      %p41 = por %p39, %p40
      %p42 = scmp.ne.s32.totalorder %s34, %s37
      %p43 = scmp.eq.s32.totalorder %s12, 0
      %p44 = por %p42, %p43
      %p45 = scmp.ne.s32.totalorder %s34, %s37
      %p46 = scmp.eq.s32.totalorder %s17, 1
      %p47 = por %p45, %p46
      %p48 = scmp.ne.s32.totalorder %s37, %s38
      %p49 = scmp.eq.s32.totalorder %s17, 0
      %p50 = por %p48, %p49
      %p51 = scmp.ne.s32.totalorder %s37, %s38
      %p52 = scmp.eq.s32.totalorder %s18, 1
      %p53 = por %p51, %p52
      %p55 = scmp.ne.s32.totalorder %s38, %s54
      %p56 = scmp.eq.s32.totalorder %s18, 0
      %p57 = por %p55, %p56
      %s58 = ssub.s32 %s20, %s27
      %p59 = scmp.eq.s32.totalorder %s58, 0
      %s61 = sadd.s32 %s60, 1
      %s62 = scalar_select %p59, %s60, %s61
      %p65 = pneg %p59
      %p66 = scmp.eq.s32.totalorder %s12, 1
      %p67 = por %p65, %p66
      %p68 = scmp.ne.s32.totalorder %s60, %s63
      %p69 = scmp.eq.s32.totalorder %s12, 0
      %p70 = por %p68, %p69
      %p71 = scmp.ne.s32.totalorder %s60, %s63
      %p72 = scmp.eq.s32.totalorder %s17, 1
      %p73 = por %p71, %p72
      %p74 = scmp.ne.s32.totalorder %s63, %s64
      %p75 = scmp.eq.s32.totalorder %s17, 0
      %p76 = por %p74, %p75
      %p77 = scmp.ne.s32.totalorder %s63, %s64
      %p78 = scmp.eq.s32.totalorder %s18, 1
      %p79 = por %p77, %p78
      %p81 = scmp.ne.s32.totalorder %s64, %s80
      %p82 = scmp.eq.s32.totalorder %s18, 0
      %p83 = por %p81, %p82
      %s84 = ssub.s32 %s19, %s31
      %s85 = ssub.s32 %s20, %s27
      %s86 = sor.u32 %s84, %s85
      %p87 = scmp.eq.s32.totalorder %s86, 0
      %s89 = sadd.s32 %s88, 1
      %s90 = scalar_select %p87, %s88, %s89
      %p93 = pneg %p87
      %p94 = scmp.eq.s32.totalorder %s12, 1
      %p95 = por %p93, %p94
      %p96 = scmp.ne.s32.totalorder %s88, %s91
      %p97 = scmp.eq.s32.totalorder %s12, 0
      %p98 = por %p96, %p97
      %p99 = scmp.ne.s32.totalorder %s88, %s91
      %p100 = scmp.eq.s32.totalorder %s17, 1
      %p101 = por %p99, %p100
      %p102 = scmp.ne.s32.totalorder %s91, %s92
      %p103 = scmp.eq.s32.totalorder %s17, 0
      %p104 = por %p102, %p103
      %p105 = scmp.ne.s32.totalorder %s91, %s92
      %p106 = scmp.eq.s32.totalorder %s18, 1
      %p107 = por %p105, %p106
      %p109 = scmp.ne.s32.totalorder %s92, %s108
      %p110 = scmp.eq.s32.totalorder %s18, 0
      %p111 = por %p109, %p110
      %p112 = scmp.le.s32.totalorder 1, %s12
      %p113 = scmp.lt.s32.totalorder %s12, 3
      %p114 = pnand %p112, %p113
      %p115 = pneg %p114
      // Predicated region
      $region9: #{mymlp_forward.3} parent=5 // pred_check
        _
      $region10: #{mymlp_forward.3} parent=5 // pred_check_branch
        %117 = sbr.rel (%p114) target = $region12
      $region11: #{mymlp_forward.3} parent=5 // pred_region
        %s118 = ssub.s32 %s12, 1
        // Predicated region
        $region13: #{mymlp_forward.3} parent=11 // pred_check
          %p119 = pneg %p76
        $region14: #{mymlp_forward.3} parent=11 // pred_check_branch
          %121 = sbr.rel (%p119) target = $region16
        $region15: #{mymlp_forward.3} parent=11 // pred_region
          %s122 = smul.u32 2, %s22
          %124 = vsyncadd [#allocation3], 0
          %s125 = smul.addr %s122, 4
          %s126 = scalar_lea.hbm %s1, %s125
          %s127 = sshll.u32 %s126, 4
          %s128 = int_to_ptr.hbm [resolvable:$true] %s127
          %s129 = sshll.u32 [#allocation2], 4
          %s130 = int_to_ptr.vmem [resolvable:$true] %s129
          %135 = dma.hbm_to_vmem [thread:$0]  %s128, 2048, %s130, [#allocation3], 128, 128, 8
        $region16: #{mymlp_forward.3} parent=11 // pred_fallthru
          _
      $region12: #{mymlp_forward.3} parent=5 // pred_fallthru
        _
      %p136 = scmp.lt.s32.totalorder %s12, 2
      // Predicated region
      $region17: #{mymlp_forward.3} parent=5 // pred_check
        %p137 = pneg %p136
      $region18: #{mymlp_forward.3} parent=5 // pred_check_branch
        %139 = sbr.rel (%p137) target = $region20
      $region19: #{mymlp_forward.3} parent=5 // pred_region
        // Predicated region
        $region21: #{mymlp_forward.3} parent=19 // pred_check
          %p140 = pneg %p44
        $region22: #{mymlp_forward.3} parent=19 // pred_check_branch
          %142 = sbr.rel (%p140) target = $region24
        $region23: #{mymlp_forward.3} parent=19 // pred_region
          %p143 = scmp.lt.s32.totalorder %s19, 1
          %s144 = scalar_select %p143, %s19, 1
          %s145 = smul.addr %s144, 4
          %s146 = scalar_lea.vmem %s0, %s145
        $region24: #{mymlp_forward.3} parent=19 // pred_fallthru
          _
      $region20: #{mymlp_forward.3} parent=5 // pred_fallthru
        _
      %p147 = scmp.le.s32.totalorder 1, %s12
      %p148 = scmp.lt.s32.totalorder %s12, 3
      %p149 = pnand %p147, %p148
      %p150 = pneg %p149
      // Predicated region
      $region25: #{mymlp_forward.3} parent=5 // pred_check
        _
      $region26: #{mymlp_forward.3} parent=5 // pred_check_branch
        %152 = sbr.rel (%p149) target = $region28
      $region27: #{mymlp_forward.3} parent=5 // pred_region
        %s153 = ssub.s32 %s12, 1
        // Predicated region
        $region29: #{mymlp_forward.3} parent=27 // pred_check
          %p154 = pneg %p76
        $region30: #{mymlp_forward.3} parent=27 // pred_check_branch
          %156 = sbr.rel (%p154) target = $region32
        $region31: #{mymlp_forward.3} parent=27 // pred_region
          %158 = dma.done [#allocation3], 2048
        $region32: #{mymlp_forward.3} parent=27 // pred_fallthru
          _
        %p159 = scmp.lt.s32.totalorder %s21, 1
        %s160 = scalar_select %p159, %s21, 1
        %s161 = smul.addr %s160, 4
        %s162 = scalar_lea.vmem %s0, %s161
        %p163 = pneg %p50
        %p164 = pneg %p47
        %p165 = pneg %p76
        %p166 = pneg %p73
        %p167 = pneg %p104
        %p168 = pneg %p101
        %s169 = sand.u32 %s91, 1
        %s170 = scalar_lea.sflag [#allocation4], %s169
        %s171 = sand.u32 %s91, 1
        %s172 = smul.addr %s171, 16
        %s173 = scalar_lea.vmem [#allocation5], %s172
        %p174 = scmp.lt.s32.totalorder %s21, 1
        %s175 = scalar_select %p174, %s21, 1
        %s176 = smul.addr %s175, 4
        %s177 = scalar_lea.vmem %s0, %s176
        %s178 = smul.u32 2, %s22
        %s179 = smul.u32 2, %s22
        %v180 = vld [vmem:[%s177] sm:$0xf]
        %v181 = vld [vmem:[#allocation2] sm:$0xff]
        %v182 = vld [vmem:[#allocation2 + $0x8] sm:$0xff]
        %v183 = vld [vmem:[#allocation2 + $0x10] sm:$0xff]
        %v184 = vld [vmem:[#allocation2 + $0x18] sm:$0xff]
        %v185 = vld [vmem:[#allocation2 + $0x20] sm:$0xff]
        %v186 = vld [vmem:[#allocation2 + $0x28] sm:$0xff]
        %v187 = vld [vmem:[#allocation2 + $0x30] sm:$0xff]
        %v188 = vld [vmem:[#allocation2 + $0x38] sm:$0xff]
        %v189 = vld [vmem:[#allocation2 + $0x40] sm:$0xff]
        %v190 = vld [vmem:[#allocation2 + $0x48] sm:$0xff]
        %v191 = vld [vmem:[#allocation2 + $0x50] sm:$0xff]
        %v192 = vld [vmem:[#allocation2 + $0x58] sm:$0xff]
        %v193 = vld [vmem:[#allocation2 + $0x60] sm:$0xff]
        %v194 = vld [vmem:[#allocation2 + $0x68] sm:$0xff]
        %v195 = vld [vmem:[#allocation2 + $0x70] sm:$0xff]
        %v196 = vld [vmem:[#allocation2 + $0x78] sm:$0xff]
        %v213 = vunpack.c.l.b16 %v181
        %v214 = vunpack.c.h.b16 %v181
        %v215 = vunpack.c.l.b16 %v182
        %v216 = vunpack.c.h.b16 %v182
        %v217 = vunpack.c.l.b16 %v183
        %v218 = vunpack.c.h.b16 %v183
        %v219 = vunpack.c.l.b16 %v184
        %v220 = vunpack.c.h.b16 %v184
        %v221 = vunpack.c.l.b16 %v185
        %v222 = vunpack.c.h.b16 %v185
        %v223 = vunpack.c.l.b16 %v186
        %v224 = vunpack.c.h.b16 %v186
        %v225 = vunpack.c.l.b16 %v187
        %v226 = vunpack.c.h.b16 %v187
        %v227 = vunpack.c.l.b16 %v188
        %v228 = vunpack.c.h.b16 %v188
        %v229 = vunpack.c.l.b16 %v189
        %v230 = vunpack.c.h.b16 %v189
        %v231 = vunpack.c.l.b16 %v190
        %v232 = vunpack.c.h.b16 %v190
        %v233 = vunpack.c.l.b16 %v191
        %v234 = vunpack.c.h.b16 %v191
        %v235 = vunpack.c.l.b16 %v192
        %v236 = vunpack.c.h.b16 %v192
        %v237 = vunpack.c.l.b16 %v193
        %v238 = vunpack.c.h.b16 %v193
        %v239 = vunpack.c.l.b16 %v194
        %v240 = vunpack.c.h.b16 %v194
        %v241 = vunpack.c.l.b16 %v195
        %v242 = vunpack.c.h.b16 %v195
        %v243 = vunpack.c.l.b16 %v196
        %v244 = vunpack.c.h.b16 %v196
        %v245 = vpack.c.b16 %v215, %v213
        %v246 = vpack.c.b16 %v216, %v214
        %v247 = vpack.c.b16 %v219, %v217
        %v248 = vpack.c.b16 %v220, %v218
        %v249 = vpack.c.b16 %v223, %v221
        %v250 = vpack.c.b16 %v224, %v222
        %v251 = vpack.c.b16 %v227, %v225
        %v252 = vpack.c.b16 %v228, %v226
        %v253 = vpack.c.b16 %v231, %v229
        %v254 = vpack.c.b16 %v232, %v230
        %v255 = vpack.c.b16 %v235, %v233
        %v256 = vpack.c.b16 %v236, %v234
        %v257 = vpack.c.b16 %v239, %v237
        %v258 = vpack.c.b16 %v240, %v238
        %v259 = vpack.c.b16 %v243, %v241
        %v260 = vpack.c.b16 %v244, %v242
        %277 = vmatpush.bf16.msra.mxu0 %v259
        %278 = vmatpush.bf16.msra.mxu0 %v257
        %279 = vmatpush.bf16.msra.mxu0 %v255
        %280 = vmatpush.bf16.msra.mxu0 %v253
        %281 = vmatpush.bf16.msra.mxu0 %v251
        %282 = vmatpush.bf16.msra.mxu0 %v249
        %283 = vmatpush.bf16.msra.mxu0 %v247
        %284 = vmatpush.bf16.msra.mxu0 %v245
        %285 = vmatmul.bf16.gmra.mxu0 %v180
        %v286 = vpop.f32.mrf.mxu0
        %v287 = vadd.f32 0.0, %v286
        %v288 = vpop.f32.mrf.mxu0
        %289 = vdwg.mxu0
        %290 = vmatpush.bf16.msra.mxu0 %v260
        %291 = vmatpush.bf16.msra.mxu0 %v258
        %292 = vmatpush.bf16.msra.mxu0 %v256
        %293 = vmatpush.bf16.msra.mxu0 %v254
        %294 = vmatpush.bf16.msra.mxu0 %v252
        %295 = vmatpush.bf16.msra.mxu0 %v250
        %296 = vmatpush.bf16.msra.mxu0 %v248
        %297 = vmatpush.bf16.msra.mxu0 %v246
        %298 = vmatmul.bf16.gmra.mxu0 %v180
        %v299 = vpop.f32.mrf.mxu0
        %v300 = vadd.f32 0.0, %v299
        %v301 = vpop.f32.mrf.mxu0
        %302 = vdwg.mxu0
        %303 = vst [vmem:[%s173] sm:$0xff] %v287
        %304 = vst [vmem:[%s173 + $0x8] sm:$0xff] %v300
        %s305 = sand.u32 %s91, 1
        %s306 = scalar_lea.sflag [#allocation4], %s305
        %s307 = sand.u32 %s91, 1
        %s308 = smul.addr %s307, 16
        %s309 = scalar_lea.vmem [#allocation5], %s308
        // Predicated region
        $region33: #{mymlp_forward.3} parent=27 // pred_check
          %p310 = pneg %p101
        $region34: #{mymlp_forward.3} parent=27 // pred_check_branch
          %312 = sbr.rel (%p310) target = $region36
        $region35: #{mymlp_forward.3} parent=27 // pred_region
          %s313 = smul.u32 2, %s22
          %315 = vsyncadd %s306, 0
          %s316 = smul.addr %s21, 2
          %s317 = sadd.s32 %s313, %s316
          %s318 = smul.addr %s317, 8
          %s319 = scalar_lea.hbm %s2, %s318
          %s321 = sshll.u32 %s309, 4
          %s322 = int_to_ptr.vmem [resolvable:$true] %s321
          %s323 = sshll.u32 %s319, 4
          %s324 = int_to_ptr.hbm [resolvable:$true] %s323
          %326 = dma.vmem_to_hbm [thread:$0]  %s322, 256, %s324, %s306
        $region36: #{mymlp_forward.3} parent=27 // pred_fallthru
          _
      $region28: #{mymlp_forward.3} parent=5 // pred_fallthru
        _
      %p327 = scmp.le.s32.totalorder 2, %s12
      // Predicated region
      $region37: #{mymlp_forward.3} parent=5 // pred_check
        %p328 = pneg %p327
      $region38: #{mymlp_forward.3} parent=5 // pred_check_branch
        %330 = sbr.rel (%p328) target = $region40
      $region39: #{mymlp_forward.3} parent=5 // pred_region
        %s331 = ssub.s32 %s12, 2
        // Predicated region
        $region41: #{mymlp_forward.3} parent=39 // pred_check
          %p332 = pneg %p107
        $region42: #{mymlp_forward.3} parent=39 // pred_check_branch
          %334 = sbr.rel (%p332) target = $region44
        $region43: #{mymlp_forward.3} parent=39 // pred_region
          %s335 = sand.u32 %s92, 1
          %s336 = scalar_lea.sflag [#allocation4], %s335
          %s337 = sand.u32 %s92, 1
          %s338 = smul.addr %s337, 16
          %s339 = scalar_lea.vmem [#allocation5], %s338
          %341 = dma.done %s336, 256
        $region44: #{mymlp_forward.3} parent=39 // pred_fallthru
          _
      $region40: #{mymlp_forward.3} parent=5 // pred_fallthru
        _
    $region6: #{mymlp_forward.3} parent=1 // loop_footer
      %s16 = sadd.s32 1, %s12
    $region7: #{mymlp_forward.3} parent=1 // loop_footer_branch
      %11 = sbr.rel target = $region3
    $region8: #{mymlp_forward.3} parent=1 // loop_exit
      _
    %342 = vsyncpa [#allocation3], 1
    %s343 = scalar_lea.sflag [#allocation3], 1
    %344 = vsyncpa %s343, 1
    %345 = vsyncpa [#allocation4], 1
    %s346 = scalar_lea.sflag [#allocation4], 1
    %347 = vsyncpa %s346, 1

// kernel: mymlp_forward.2
$region0: #{mymlp_forward.2}
  #allocation0 [shape = 'u32[]', space=smem, size = 0x4, offset = 0x4, fixed_abs, tag = 'smem constant byte address 0x4 - core index']
  #allocation1 [shape = 'u32[72,128]{1,0:T(1,128)}', space=vmem, size = 0x9000, scoped, tag = 'internal scratch']
  %s0 = inlined_call_operand.vmem [shape: bf16[16,128], index: 0, kind: input, shape index: {}]
  %s1 = inlined_call_operand.hbm [shape: bf16[4,128,512], index: 1, kind: input, shape index: {}]
  %s2 = inlined_call_operand.vmem [shape: f32[4,1,512], index: 2, kind: input, shape index: {}]
  %s3 = inlined_call_operand.hbm [shape: bf16[4,512,128], index: 3, kind: input, shape index: {}]
  %s4 = inlined_call_operand.vmem [shape: f32[4,1,128], index: 4, kind: input, shape index: {}]
  %s5 = inlined_call_operand.vmem [shape: f32[1,128], index: 5, kind: input, shape index: {}]
  %s6 = inlined_call_operand.vmem [shape: f32[1,128], index: 6, kind: input, shape index: {}]
  %s7 = inlined_call_operand.vmem [shape: bf16[16,128], index: 7, kind: output, shape index: {}]
  %s8 = sld [smem:[#allocation0]]
  $region69: #{mymlp_forward.2} parent=0
    _
  %s10 = ssub.s32 1, %s8
  %s11 = scalar_select 0, %s10, %s8
  $region1: #{mymlp_forward.2} parent=0
    #allocation2 [shape = 'u8[524288]{0}', space=vmem, size = 0x80000, scoped, tag = 'input window, operand 1, single buffered']
    #allocation3 [shape = 's32[2]{0}', space=sflag, size = 0x8, scoped, tag = 'scoped memory for mymlp_forward.2']
    #allocation4 [shape = 'u8[524288]{0}', space=vmem, size = 0x80000, scoped, tag = 'input window, operand 3, single buffered']
    #allocation5 [shape = 's32[1]{0}', space=sflag, size = 0x4, scoped, tag = 'scoped memory for mymlp_forward.2']
    %12 = vsyncpa [#allocation3], 0
    %13 = vsyncpa [#allocation5], 0
    loop: start=0, step=1, limit=4
    $region2: #{mymlp_forward.2} parent=1 // loop_pre_header
      _
    $region3: #{mymlp_forward.2} parent=1 // loop_header
      %s15 = sphi 0, %s19
      %p16 = scmp.ge.s32.totalorder %s15, 4
      %s25 = sphi 0, %s27
      %s28 = sphi 0, %s25
      %s29 = sphi 0, %s28
      %s45 = sphi 0, %s29
      %s49 = sphi 0, %s49
      %s51 = sphi 0, %s49
      %s52 = sphi 0, %s51
      %s66 = sphi 0, %s52
      %s70 = sphi 0, %s70
      %s72 = sphi 0, %s70
      %s73 = sphi 0, %s72
      %s87 = sphi 0, %s73
      %s91 = sphi 0, %s91
      %s93 = sphi 0, %s91
      %s94 = sphi 0, %s93
      %s108 = sphi 0, %s94
      %s112 = sphi 0, %s112
      %s114 = sphi 0, %s112
      %s115 = sphi 0, %s114
      %s129 = sphi 0, %s115
      %s133 = sphi 0, %s133
      %s135 = sphi 0, %s133
      %s136 = sphi 0, %s135
      %s150 = sphi 0, %s136
      %s154 = sphi 0, %s154
      %s156 = sphi 0, %s154
      %s157 = sphi 0, %s156
      %s171 = sphi 0, %s157
      %s177 = sphi 0, %s179
      %s180 = sphi 0, %s177
      %s181 = sphi 0, %s180
      %s197 = sphi 0, %s181
    $region4: #{mymlp_forward.2} parent=1 // loop_header_branch
      %18 = sbr.rel (%p16) target = $region8
    $region5: #{mymlp_forward.2} parent=1 // loop_body
      %s20 = ssub.s32 %s15, 1
      %s21 = ssub.s32 %s15, 2
      %s22 = sadd.s32 %s15, 1
      %s23 = ssub.s32 %s15, %s22
      %p24 = scmp.eq.s32.totalorder %s23, 0
      %s26 = sadd.s32 %s25, 1
      %s27 = scalar_select %p24, %s25, %s26
      %p30 = pneg %p24
      %p31 = scmp.eq.s32.totalorder %s15, 1
      %p32 = por %p30, %p31
      %p33 = scmp.ne.s32.totalorder %s25, %s28
      %p34 = scmp.eq.s32.totalorder %s15, 0
      %p35 = por %p33, %p34
      %p36 = scmp.ne.s32.totalorder %s25, %s28
      %p37 = scmp.eq.s32.totalorder %s20, 1
      %p38 = por %p36, %p37
      %p39 = scmp.ne.s32.totalorder %s28, %s29
      %p40 = scmp.eq.s32.totalorder %s20, 0
      %p41 = por %p39, %p40
      %p42 = scmp.ne.s32.totalorder %s28, %s29
      %p43 = scmp.eq.s32.totalorder %s21, 1
      %p44 = por %p42, %p43
      %p46 = scmp.ne.s32.totalorder %s29, %s45
      %p47 = scmp.eq.s32.totalorder %s21, 0
      %p48 = por %p46, %p47
      %s50 = sadd.s32 %s49, 1
      %p53 = scmp.eq.s32.totalorder %s15, 1
      %p54 = scmp.ne.s32.totalorder %s49, %s51
      %p55 = scmp.eq.s32.totalorder %s15, 0
      %p56 = por %p54, %p55
      %p57 = scmp.ne.s32.totalorder %s49, %s51
      %p58 = scmp.eq.s32.totalorder %s20, 1
      %p59 = por %p57, %p58
      %p60 = scmp.ne.s32.totalorder %s51, %s52
      %p61 = scmp.eq.s32.totalorder %s20, 0
      %p62 = por %p60, %p61
      %p63 = scmp.ne.s32.totalorder %s51, %s52
      %p64 = scmp.eq.s32.totalorder %s21, 1
      %p65 = por %p63, %p64
      %p67 = scmp.ne.s32.totalorder %s52, %s66
      %p68 = scmp.eq.s32.totalorder %s21, 0
      %p69 = por %p67, %p68
      %s71 = sadd.s32 %s70, 1
      %p74 = scmp.eq.s32.totalorder %s15, 1
      %p75 = scmp.ne.s32.totalorder %s70, %s72
      %p76 = scmp.eq.s32.totalorder %s15, 0
      %p77 = por %p75, %p76
      %p78 = scmp.ne.s32.totalorder %s70, %s72
      %p79 = scmp.eq.s32.totalorder %s20, 1
      %p80 = por %p78, %p79
      %p81 = scmp.ne.s32.totalorder %s72, %s73
      %p82 = scmp.eq.s32.totalorder %s20, 0
      %p83 = por %p81, %p82
      %p84 = scmp.ne.s32.totalorder %s72, %s73
      %p85 = scmp.eq.s32.totalorder %s21, 1
      %p86 = por %p84, %p85
      %p88 = scmp.ne.s32.totalorder %s73, %s87
      %p89 = scmp.eq.s32.totalorder %s21, 0
      %p90 = por %p88, %p89
      %s92 = sadd.s32 %s91, 1
      %p95 = scmp.eq.s32.totalorder %s15, 1
      %p96 = scmp.ne.s32.totalorder %s91, %s93
      %p97 = scmp.eq.s32.totalorder %s15, 0
      %p98 = por %p96, %p97
      %p99 = scmp.ne.s32.totalorder %s91, %s93
      %p100 = scmp.eq.s32.totalorder %s20, 1
      %p101 = por %p99, %p100
      %p102 = scmp.ne.s32.totalorder %s93, %s94
      %p103 = scmp.eq.s32.totalorder %s20, 0
      %p104 = por %p102, %p103
      %p105 = scmp.ne.s32.totalorder %s93, %s94
      %p106 = scmp.eq.s32.totalorder %s21, 1
      %p107 = por %p105, %p106
      %p109 = scmp.ne.s32.totalorder %s94, %s108
      %p110 = scmp.eq.s32.totalorder %s21, 0
      %p111 = por %p109, %p110
      %s113 = sadd.s32 %s112, 1
      %p116 = scmp.eq.s32.totalorder %s15, 1
      %p117 = scmp.ne.s32.totalorder %s112, %s114
      %p118 = scmp.eq.s32.totalorder %s15, 0
      %p119 = por %p117, %p118
      %p120 = scmp.ne.s32.totalorder %s112, %s114
      %p121 = scmp.eq.s32.totalorder %s20, 1
      %p122 = por %p120, %p121
      %p123 = scmp.ne.s32.totalorder %s114, %s115
      %p124 = scmp.eq.s32.totalorder %s20, 0
      %p125 = por %p123, %p124
      %p126 = scmp.ne.s32.totalorder %s114, %s115
      %p127 = scmp.eq.s32.totalorder %s21, 1
      %p128 = por %p126, %p127
      %p130 = scmp.ne.s32.totalorder %s115, %s129
      %p131 = scmp.eq.s32.totalorder %s21, 0
      %p132 = por %p130, %p131
      %s134 = sadd.s32 %s133, 1
      %p137 = scmp.eq.s32.totalorder %s15, 1
      %p138 = scmp.ne.s32.totalorder %s133, %s135
      %p139 = scmp.eq.s32.totalorder %s15, 0
      %p140 = por %p138, %p139
      %p141 = scmp.ne.s32.totalorder %s133, %s135
      %p142 = scmp.eq.s32.totalorder %s20, 1
      %p143 = por %p141, %p142
      %p144 = scmp.ne.s32.totalorder %s135, %s136
      %p145 = scmp.eq.s32.totalorder %s20, 0
      %p146 = por %p144, %p145
      %p147 = scmp.ne.s32.totalorder %s135, %s136
      %p148 = scmp.eq.s32.totalorder %s21, 1
      %p149 = por %p147, %p148
      %p151 = scmp.ne.s32.totalorder %s136, %s150
      %p152 = scmp.eq.s32.totalorder %s21, 0
      %p153 = por %p151, %p152
      %s155 = sadd.s32 %s154, 1
      %p158 = scmp.eq.s32.totalorder %s15, 1
      %p159 = scmp.ne.s32.totalorder %s154, %s156
      %p160 = scmp.eq.s32.totalorder %s15, 0
      %p161 = por %p159, %p160
      %p162 = scmp.ne.s32.totalorder %s154, %s156
      %p163 = scmp.eq.s32.totalorder %s20, 1
      %p164 = por %p162, %p163
      %p165 = scmp.ne.s32.totalorder %s156, %s157
      %p166 = scmp.eq.s32.totalorder %s20, 0
      %p167 = por %p165, %p166
      %p168 = scmp.ne.s32.totalorder %s156, %s157
      %p169 = scmp.eq.s32.totalorder %s21, 1
      %p170 = por %p168, %p169
      %p172 = scmp.ne.s32.totalorder %s157, %s171
      %p173 = scmp.eq.s32.totalorder %s21, 0
      %p174 = por %p172, %p173
      %s175 = ssub.s32 %s15, %s22
      %p176 = scmp.eq.s32.totalorder %s175, 0
      %s178 = sadd.s32 %s177, 1
      %s179 = scalar_select %p176, %s177, %s178
      %p182 = pneg %p176
      %p183 = scmp.eq.s32.totalorder %s15, 1
      %p184 = por %p182, %p183
      %p185 = scmp.ne.s32.totalorder %s177, %s180
      %p186 = scmp.eq.s32.totalorder %s15, 0
      %p187 = por %p185, %p186
      %p188 = scmp.ne.s32.totalorder %s177, %s180
      %p189 = scmp.eq.s32.totalorder %s20, 1
      %p190 = por %p188, %p189
      %p191 = scmp.ne.s32.totalorder %s180, %s181
      %p192 = scmp.eq.s32.totalorder %s20, 0
      %p193 = por %p191, %p192
      %p194 = scmp.ne.s32.totalorder %s180, %s181
      %p195 = scmp.eq.s32.totalorder %s21, 1
      %p196 = por %p194, %p195
      %p198 = scmp.ne.s32.totalorder %s181, %s197
      %p199 = scmp.eq.s32.totalorder %s21, 0
      %p200 = por %p198, %p199
      %p201 = scmp.le.s32.totalorder 1, %s15
      %p202 = scmp.lt.s32.totalorder %s15, 3
      %p203 = pnand %p201, %p202
      %p204 = pneg %p203
      // Predicated region
      $region9: #{mymlp_forward.2} parent=5 // pred_check
        _
      $region10: #{mymlp_forward.2} parent=5 // pred_check_branch
        %206 = sbr.rel (%p203) target = $region12
      $region11: #{mymlp_forward.2} parent=5 // pred_region
        %s207 = ssub.s32 %s15, 1
        // Predicated region
        $region13: #{mymlp_forward.2} parent=11 // pred_check
          %p208 = pneg %p62
        $region14: #{mymlp_forward.2} parent=11 // pred_check_branch
          %210 = sbr.rel (%p208) target = $region16
        $region15: #{mymlp_forward.2} parent=11 // pred_region
          %212 = vsyncadd [#allocation3], 0
          %s213 = sshll.u32 %s1, 4
          %s214 = int_to_ptr.hbm [resolvable:$true] %s213
          %s215 = sshll.u32 [#allocation2], 4
          %s216 = int_to_ptr.vmem [resolvable:$true] %s215
          %221 = dma.hbm_to_vmem [thread:$0]  %s214, 16384, %s216, [#allocation3], 256, 256, 16
        $region16: #{mymlp_forward.2} parent=11 // pred_fallthru
          _
        // Predicated region
        $region17: #{mymlp_forward.2} parent=11 // pred_check
          %p222 = pneg %p83
        $region18: #{mymlp_forward.2} parent=11 // pred_check_branch
          %224 = sbr.rel (%p222) target = $region20
        $region19: #{mymlp_forward.2} parent=11 // pred_region
          _
        $region20: #{mymlp_forward.2} parent=11 // pred_fallthru
          _
        // Predicated region
        $region21: #{mymlp_forward.2} parent=11 // pred_check
          %p225 = pneg %p104
        $region22: #{mymlp_forward.2} parent=11 // pred_check_branch
          %227 = sbr.rel (%p225) target = $region24
        $region23: #{mymlp_forward.2} parent=11 // pred_region
          %229 = vsyncadd [#allocation5], 0
          %s230 = sshll.u32 %s3, 4
          %s231 = int_to_ptr.hbm [resolvable:$true] %s230
          %s232 = sshll.u32 [#allocation4], 4
          %s233 = int_to_ptr.vmem [resolvable:$true] %s232
          %238 = dma.hbm_to_vmem [thread:$0]  %s231, 16384, %s233, [#allocation5], 64, 64, 4
        $region24: #{mymlp_forward.2} parent=11 // pred_fallthru
          _
        // Predicated region
        $region25: #{mymlp_forward.2} parent=11 // pred_check
          %p239 = pneg %p125
        $region26: #{mymlp_forward.2} parent=11 // pred_check_branch
          %241 = sbr.rel (%p239) target = $region28
        $region27: #{mymlp_forward.2} parent=11 // pred_region
          _
        $region28: #{mymlp_forward.2} parent=11 // pred_fallthru
          _
        // Predicated region
        $region29: #{mymlp_forward.2} parent=11 // pred_check
          %p242 = pneg %p146
        $region30: #{mymlp_forward.2} parent=11 // pred_check_branch
          %244 = sbr.rel (%p242) target = $region32
        $region31: #{mymlp_forward.2} parent=11 // pred_region
          _
        $region32: #{mymlp_forward.2} parent=11 // pred_fallthru
          _
        // Predicated region
        $region33: #{mymlp_forward.2} parent=11 // pred_check
          %p245 = pneg %p167
        $region34: #{mymlp_forward.2} parent=11 // pred_check_branch
          %247 = sbr.rel (%p245) target = $region36
        $region35: #{mymlp_forward.2} parent=11 // pred_region
          _
        $region36: #{mymlp_forward.2} parent=11 // pred_fallthru
          _
      $region12: #{mymlp_forward.2} parent=5 // pred_fallthru
        _
      %p248 = scmp.lt.s32.totalorder %s15, 2
      // Predicated region
      $region37: #{mymlp_forward.2} parent=5 // pred_check
        %p249 = pneg %p248
      $region38: #{mymlp_forward.2} parent=5 // pred_check_branch
        %251 = sbr.rel (%p249) target = $region40
      $region39: #{mymlp_forward.2} parent=5 // pred_region
        // Predicated region
        $region41: #{mymlp_forward.2} parent=39 // pred_check
          %p252 = pneg %p35
        $region42: #{mymlp_forward.2} parent=39 // pred_check_branch
          %254 = sbr.rel (%p252) target = $region44
        $region43: #{mymlp_forward.2} parent=39 // pred_region
          %p255 = scmp.lt.s32.totalorder %s15, 1
          %s256 = scalar_select %p255, %s15, 1
          %s257 = smul.addr %s256, 4
          %s258 = scalar_lea.vmem %s0, %s257
        $region44: #{mymlp_forward.2} parent=39 // pred_fallthru
          _
      $region40: #{mymlp_forward.2} parent=5 // pred_fallthru
        _
      %p259 = scmp.le.s32.totalorder 1, %s15
      %p260 = scmp.lt.s32.totalorder %s15, 3
      %p261 = pnand %p259, %p260
      %p262 = pneg %p261
      // Predicated region
      $region45: #{mymlp_forward.2} parent=5 // pred_check
        _
      $region46: #{mymlp_forward.2} parent=5 // pred_check_branch
        %264 = sbr.rel (%p261) target = $region48
      $region47: #{mymlp_forward.2} parent=5 // pred_region
        %s265 = ssub.s32 %s15, 1
        // Predicated region
        $region49: #{mymlp_forward.2} parent=47 // pred_check
          %p266 = pneg %p62
        $region50: #{mymlp_forward.2} parent=47 // pred_check_branch
          %268 = sbr.rel (%p266) target = $region52
        $region51: #{mymlp_forward.2} parent=47 // pred_region
          %270 = dma.done [#allocation3], 16384
        $region52: #{mymlp_forward.2} parent=47 // pred_fallthru
          _
        // Predicated region
        $region53: #{mymlp_forward.2} parent=47 // pred_check
          %p271 = pneg %p104
        $region54: #{mymlp_forward.2} parent=47 // pred_check_branch
          %273 = sbr.rel (%p271) target = $region56
        $region55: #{mymlp_forward.2} parent=47 // pred_region
          %275 = dma.done [#allocation5], 16384
        $region56: #{mymlp_forward.2} parent=47 // pred_fallthru
          _
        %p276 = scmp.lt.s32.totalorder %s20, 1
        %s277 = scalar_select %p276, %s20, 1
        %s278 = smul.addr %s277, 4
        %s279 = scalar_lea.vmem %s0, %s278
        %p280 = pneg %p41
        %p281 = pneg %p38
        %p282 = pneg %p62
        %p283 = pneg %p59
        %p284 = pneg %p83
        %p285 = pneg %p80
        %p286 = pneg %p104
        %p287 = pneg %p101
        %p288 = pneg %p125
        %p289 = pneg %p122
        %p290 = pneg %p146
        %p291 = pneg %p143
        %p292 = pneg %p167
        %p293 = pneg %p164
        %p294 = pneg %p193
        %p295 = pneg %p190
        %p296 = scmp.lt.s32.totalorder %s20, 1
        %s297 = scalar_select %p296, %s20, 1
        %s298 = smul.addr %s297, 4
        %s299 = scalar_lea.vmem %s7, %s298
        %p300 = scmp.lt.s32.totalorder %s20, 1
        %s301 = scalar_select %p300, %s20, 1
        %s302 = smul.addr %s301, 4
        %s303 = scalar_lea.vmem %s0, %s302
        %p304 = scmp.lt.s32.totalorder %s20, 1
        %s305 = scalar_select %p304, %s20, 1
        %s306 = smul.addr %s305, 4
        %s307 = scalar_lea.vmem %s7, %s306
        %v308 = vld [vmem:[%s303] sm:$0xf]
        %v309 = vunpack.c.l.bf16 %v308
        %v310 = vld [vmem:[#allocation2] sm:$0xff]
        %v311 = vld [vmem:[#allocation2 + $0x8] sm:$0xff]
        %v312 = vld [vmem:[#allocation2 + $0x10] sm:$0xff]
        %v313 = vld [vmem:[#allocation2 + $0x18] sm:$0xff]
        %v314 = vld [vmem:[#allocation2 + $0x20] sm:$0xff]
        %v315 = vld [vmem:[#allocation2 + $0x28] sm:$0xff]
        %v316 = vld [vmem:[#allocation2 + $0x30] sm:$0xff]
        %v317 = vld [vmem:[#allocation2 + $0x38] sm:$0xff]
        %v318 = vld [vmem:[#allocation2 + $0x40] sm:$0xff]
        %v319 = vld [vmem:[#allocation2 + $0x48] sm:$0xff]
        %v320 = vld [vmem:[#allocation2 + $0x50] sm:$0xff]
        %v321 = vld [vmem:[#allocation2 + $0x58] sm:$0xff]
        %v322 = vld [vmem:[#allocation2 + $0x60] sm:$0xff]
        %v323 = vld [vmem:[#allocation2 + $0x68] sm:$0xff]
        %v324 = vld [vmem:[#allocation2 + $0x70] sm:$0xff]
        %v325 = vld [vmem:[#allocation2 + $0x78] sm:$0xff]
        %v326 = vld [vmem:[#allocation2 + $0x80] sm:$0xff]
        %v327 = vld [vmem:[#allocation2 + $0x88] sm:$0xff]
        %v328 = vld [vmem:[#allocation2 + $0x90] sm:$0xff]
        %v329 = vld [vmem:[#allocation2 + $0x98] sm:$0xff]
        %v330 = vld [vmem:[#allocation2 + $0xa0] sm:$0xff]
        %v331 = vld [vmem:[#allocation2 + $0xa8] sm:$0xff]
        %v332 = vld [vmem:[#allocation2 + $0xb0] sm:$0xff]
        %v333 = vld [vmem:[#allocation2 + $0xb8] sm:$0xff]
        %v334 = vld [vmem:[#allocation2 + $0xc0] sm:$0xff]
        %v335 = vld [vmem:[#allocation2 + $0xc8] sm:$0xff]
        %v336 = vld [vmem:[#allocation2 + $0xd0] sm:$0xff]
        %v337 = vld [vmem:[#allocation2 + $0xd8] sm:$0xff]
        %v338 = vld [vmem:[#allocation2 + $0xe0] sm:$0xff]
        %v339 = vld [vmem:[#allocation2 + $0xe8] sm:$0xff]
        %v340 = vld [vmem:[#allocation2 + $0xf0] sm:$0xff]
        %v341 = vld [vmem:[#allocation2 + $0xf8] sm:$0xff]
        %v342 = vld [vmem:[%s2] sm:$0xf]
        %v344 = vperm.slane %v342, 0
        %v345 = vperm.slane %v342, 1
        %v346 = vperm.slane %v342, 2
        %v347 = vperm.slane %v342, 3
        %v384 = vunpack.c.l.b16 %v310
        %v385 = vunpack.c.h.b16 %v310
        %v386 = vunpack.c.l.b16 %v311
        %v387 = vunpack.c.h.b16 %v311
        %v388 = vunpack.c.l.b16 %v312
        %v389 = vunpack.c.h.b16 %v312
        %v390 = vunpack.c.l.b16 %v313
        %v391 = vunpack.c.h.b16 %v313
        %v392 = vunpack.c.l.b16 %v314
        %v393 = vunpack.c.h.b16 %v314
        %v394 = vunpack.c.l.b16 %v315
        %v395 = vunpack.c.h.b16 %v315
        %v396 = vunpack.c.l.b16 %v316
        %v397 = vunpack.c.h.b16 %v316
        %v398 = vunpack.c.l.b16 %v317
        %v399 = vunpack.c.h.b16 %v317
        %v400 = vunpack.c.l.b16 %v318
        %v401 = vunpack.c.h.b16 %v318
        %v402 = vunpack.c.l.b16 %v319
        %v403 = vunpack.c.h.b16 %v319
        %v404 = vunpack.c.l.b16 %v320
        %v405 = vunpack.c.h.b16 %v320
        %v406 = vunpack.c.l.b16 %v321
        %v407 = vunpack.c.h.b16 %v321
        %v408 = vunpack.c.l.b16 %v322
        %v409 = vunpack.c.h.b16 %v322
        %v410 = vunpack.c.l.b16 %v323
        %v411 = vunpack.c.h.b16 %v323
        %v412 = vunpack.c.l.b16 %v324
        %v413 = vunpack.c.h.b16 %v324
        %v414 = vunpack.c.l.b16 %v325
        %v415 = vunpack.c.h.b16 %v325
        %v416 = vunpack.c.l.b16 %v326
        %v417 = vunpack.c.h.b16 %v326
        %v418 = vunpack.c.l.b16 %v327
        %v419 = vunpack.c.h.b16 %v327
        %v420 = vunpack.c.l.b16 %v328
        %v421 = vunpack.c.h.b16 %v328
        %v422 = vunpack.c.l.b16 %v329
        %v423 = vunpack.c.h.b16 %v329
        %v424 = vunpack.c.l.b16 %v330
        %v425 = vunpack.c.h.b16 %v330
        %v426 = vunpack.c.l.b16 %v331
        %v427 = vunpack.c.h.b16 %v331
        %v428 = vunpack.c.l.b16 %v332
        %v429 = vunpack.c.h.b16 %v332
        %v430 = vunpack.c.l.b16 %v333
        %v431 = vunpack.c.h.b16 %v333
        %v432 = vunpack.c.l.b16 %v334
        %v433 = vunpack.c.h.b16 %v334
        %v434 = vunpack.c.l.b16 %v335
        %v435 = vunpack.c.h.b16 %v335
        %v436 = vunpack.c.l.b16 %v336
        %v437 = vunpack.c.h.b16 %v336
        %v438 = vunpack.c.l.b16 %v337
        %v439 = vunpack.c.h.b16 %v337
        %v440 = vunpack.c.l.b16 %v338
        %v441 = vunpack.c.h.b16 %v338
        %v442 = vunpack.c.l.b16 %v339
        %v443 = vunpack.c.h.b16 %v339
        %v444 = vunpack.c.l.b16 %v340
        %v445 = vunpack.c.h.b16 %v340
        %v446 = vunpack.c.l.b16 %v341
        %v447 = vunpack.c.h.b16 %v341
        %v448 = vpack.c.b16 %v388, %v384
        %v449 = vpack.c.b16 %v389, %v385
        %v450 = vpack.c.b16 %v390, %v386
        %v451 = vpack.c.b16 %v391, %v387
        %v452 = vpack.c.b16 %v396, %v392
        %v453 = vpack.c.b16 %v397, %v393
        %v454 = vpack.c.b16 %v398, %v394
        %v455 = vpack.c.b16 %v399, %v395
        %v456 = vpack.c.b16 %v404, %v400
        %v457 = vpack.c.b16 %v405, %v401
        %v458 = vpack.c.b16 %v406, %v402
        %v459 = vpack.c.b16 %v407, %v403
        %v460 = vpack.c.b16 %v412, %v408
        %v461 = vpack.c.b16 %v413, %v409
        %v462 = vpack.c.b16 %v414, %v410
        %v463 = vpack.c.b16 %v415, %v411
        %v464 = vpack.c.b16 %v420, %v416
        %v465 = vpack.c.b16 %v421, %v417
        %v466 = vpack.c.b16 %v422, %v418
        %v467 = vpack.c.b16 %v423, %v419
        %v468 = vpack.c.b16 %v428, %v424
        %v469 = vpack.c.b16 %v429, %v425
        %v470 = vpack.c.b16 %v430, %v426
        %v471 = vpack.c.b16 %v431, %v427
        %v472 = vpack.c.b16 %v436, %v432
        %v473 = vpack.c.b16 %v437, %v433
        %v474 = vpack.c.b16 %v438, %v434
        %v475 = vpack.c.b16 %v439, %v435
        %v476 = vpack.c.b16 %v444, %v440
        %v477 = vpack.c.b16 %v445, %v441
        %v478 = vpack.c.b16 %v446, %v442
        %v479 = vpack.c.b16 %v447, %v443
        %512 = vmatpush.bf16.msra.mxu0 %v476
        %513 = vmatpush.bf16.msra.mxu0 %v472
        %514 = vmatpush.bf16.msra.mxu0 %v468
        %515 = vmatpush.bf16.msra.mxu0 %v464
        %516 = vmatpush.bf16.msra.mxu0 %v460
        %517 = vmatpush.bf16.msra.mxu0 %v456
        %518 = vmatpush.bf16.msra.mxu0 %v452
        %519 = vmatpush.bf16.msra.mxu0 %v448
        %520 = vmatmul.bf16.gmra.mxu0 %v308
        %v521 = vpop.f32.mrf.mxu0
        %v522 = vadd.f32 %v344, %v521
        %v523 = vpop.f32.mrf.mxu0
        %524 = vdwg.mxu0
        %525 = vmatpush.bf16.msra.mxu0 %v477
        %526 = vmatpush.bf16.msra.mxu0 %v473
        %527 = vmatpush.bf16.msra.mxu0 %v469
        %528 = vmatpush.bf16.msra.mxu0 %v465
        %529 = vmatpush.bf16.msra.mxu0 %v461
        %530 = vmatpush.bf16.msra.mxu0 %v457
        %531 = vmatpush.bf16.msra.mxu0 %v453
        %532 = vmatpush.bf16.msra.mxu0 %v449
        %533 = vmatmul.bf16.gmra.mxu0 %v308
        %v534 = vpop.f32.mrf.mxu0
        %v535 = vadd.f32 %v345, %v534
        %v536 = vpop.f32.mrf.mxu0
        %537 = vdwg.mxu0
        %538 = vmatpush.bf16.msra.mxu0 %v478
        %539 = vmatpush.bf16.msra.mxu0 %v474
        %540 = vmatpush.bf16.msra.mxu0 %v470
        %541 = vmatpush.bf16.msra.mxu0 %v466
        %542 = vmatpush.bf16.msra.mxu0 %v462
        %543 = vmatpush.bf16.msra.mxu0 %v458
        %544 = vmatpush.bf16.msra.mxu0 %v454
        %545 = vmatpush.bf16.msra.mxu0 %v450
        %546 = vmatmul.bf16.gmra.mxu0 %v308
        %v547 = vpop.f32.mrf.mxu0
        %v548 = vadd.f32 %v346, %v547
        %v549 = vpop.f32.mrf.mxu0
        %550 = vdwg.mxu0
        %551 = vmatpush.bf16.msra.mxu0 %v479
        %552 = vmatpush.bf16.msra.mxu0 %v475
        %553 = vmatpush.bf16.msra.mxu0 %v471
        %554 = vmatpush.bf16.msra.mxu0 %v467
        %555 = vmatpush.bf16.msra.mxu0 %v463
        %556 = vmatpush.bf16.msra.mxu0 %v459
        %557 = vmatpush.bf16.msra.mxu0 %v455
        %558 = vmatpush.bf16.msra.mxu0 %v451
        %559 = vmatmul.bf16.gmra.mxu0 %v308
        %v560 = vpop.f32.mrf.mxu0
        %v561 = vadd.f32 %v347, %v560
        %v562 = vpop.f32.mrf.mxu0
        %563 = vdwg.mxu0
        %v564 = vmul.f32 %v522, 0.5
        %v565 = vmul.f32 %v535, 0.5
        %v566 = vmul.f32 %v548, 0.5
        %v567 = vmul.f32 %v561, 0.5
        %v568 = vmul.f32 %v522, 0.044715
        %v569 = vmul.f32 %v535, 0.044715
        %v570 = vmul.f32 %v548, 0.044715
        %v571 = vmul.f32 %v561, 0.044715
        %v572 = vmul.f32 %v568, %v522
        %v573 = vmul.f32 %v569, %v535
        %v574 = vmul.f32 %v570, %v548
        %v575 = vmul.f32 %v571, %v561
        %v576 = vmul.f32 %v572, %v522
        %v577 = vmul.f32 %v573, %v535
        %v578 = vmul.f32 %v574, %v548
        %v579 = vmul.f32 %v575, %v561
        %v580 = vadd.f32 %v522, %v576
        %v581 = vadd.f32 %v535, %v577
        %v582 = vadd.f32 %v548, %v578
        %v583 = vadd.f32 %v561, %v579
        %v584 = vmul.f32 %v580, 0.7978846
        %v585 = vmul.f32 %v581, 0.7978846
        %v586 = vmul.f32 %v582, 0.7978846
        %v587 = vmul.f32 %v583, 0.7978846
        %v588 = vtanh.pop %v584
        %v589 = vtanh.pop %v585
        %v590 = vtanh.pop %v586
        %v591 = vtanh.pop %v587
        %v592 = vadd.f32 %v588, 1.0
        %v593 = vadd.f32 %v589, 1.0
        %v594 = vadd.f32 %v590, 1.0
        %v595 = vadd.f32 %v591, 1.0
        %v596 = vmul.f32 %v564, %v592
        %v597 = vmul.f32 %v565, %v593
        %v598 = vmul.f32 %v566, %v594
        %v599 = vmul.f32 %v567, %v595
        %v600 = vpack.c.bf16 %v596, %v596
        %v601 = vpack.c.bf16 %v597, %v597
        %v602 = vpack.c.bf16 %v598, %v598
        %v603 = vpack.c.bf16 %v599, %v599
        %v604 = vld [vmem:[#allocation4] sm:$0xf]
        %v605 = vld [vmem:[#allocation4 + $0x4] sm:$0xf]
        %v606 = vld [vmem:[#allocation4 + $0x8] sm:$0xf]
        %v607 = vld [vmem:[#allocation4 + $0xc] sm:$0xf]
        %v608 = vld [vmem:[#allocation4 + $0x10] sm:$0xf]
        %v609 = vld [vmem:[#allocation4 + $0x14] sm:$0xf]
        %v610 = vld [vmem:[#allocation4 + $0x18] sm:$0xf]
        %v611 = vld [vmem:[#allocation4 + $0x1c] sm:$0xf]
        %v612 = vld [vmem:[#allocation4 + $0x20] sm:$0xf]
        %v613 = vld [vmem:[#allocation4 + $0x24] sm:$0xf]
        %v614 = vld [vmem:[#allocation4 + $0x28] sm:$0xf]
        %v615 = vld [vmem:[#allocation4 + $0x2c] sm:$0xf]
        %v616 = vld [vmem:[#allocation4 + $0x30] sm:$0xf]
        %v617 = vld [vmem:[#allocation4 + $0x34] sm:$0xf]
        %v618 = vld [vmem:[#allocation4 + $0x38] sm:$0xf]
        %v619 = vld [vmem:[#allocation4 + $0x3c] sm:$0xf]
        %v620 = vld [vmem:[#allocation4 + $0x40] sm:$0xf]
        %v621 = vld [vmem:[#allocation4 + $0x44] sm:$0xf]
        %v622 = vld [vmem:[#allocation4 + $0x48] sm:$0xf]
        %v623 = vld [vmem:[#allocation4 + $0x4c] sm:$0xf]
        %v624 = vld [vmem:[#allocation4 + $0x50] sm:$0xf]
        %v625 = vld [vmem:[#allocation4 + $0x54] sm:$0xf]
        %v626 = vld [vmem:[#allocation4 + $0x58] sm:$0xf]
        %v627 = vld [vmem:[#allocation4 + $0x5c] sm:$0xf]
        %v628 = vld [vmem:[#allocation4 + $0x60] sm:$0xf]
        %v629 = vld [vmem:[#allocation4 + $0x64] sm:$0xf]
        %v630 = vld [vmem:[#allocation4 + $0x68] sm:$0xf]
        %v631 = vld [vmem:[#allocation4 + $0x6c] sm:$0xf]
        %v632 = vld [vmem:[#allocation4 + $0x70] sm:$0xf]
        %v633 = vld [vmem:[#allocation4 + $0x74] sm:$0xf]
        %v634 = vld [vmem:[#allocation4 + $0x78] sm:$0xf]
        %v635 = vld [vmem:[#allocation4 + $0x7c] sm:$0xf]
        %v636 = vld [vmem:[#allocation4 + $0x80] sm:$0xf]
        %v637 = vld [vmem:[#allocation4 + $0x84] sm:$0xf]
        %v638 = vld [vmem:[#allocation4 + $0x88] sm:$0xf]
        %v639 = vld [vmem:[#allocation4 + $0x8c] sm:$0xf]
        %v640 = vld [vmem:[#allocation4 + $0x90] sm:$0xf]
        %v641 = vld [vmem:[#allocation4 + $0x94] sm:$0xf]
        %v642 = vld [vmem:[#allocation4 + $0x98] sm:$0xf]
        %v643 = vld [vmem:[#allocation4 + $0x9c] sm:$0xf]
        %v644 = vld [vmem:[#allocation4 + $0xa0] sm:$0xf]
        %v645 = vld [vmem:[#allocation4 + $0xa4] sm:$0xf]
        %v646 = vld [vmem:[#allocation4 + $0xa8] sm:$0xf]
        %v647 = vld [vmem:[#allocation4 + $0xac] sm:$0xf]
        %v648 = vld [vmem:[#allocation4 + $0xb0] sm:$0xf]
        %v649 = vld [vmem:[#allocation4 + $0xb4] sm:$0xf]
        %v650 = vld [vmem:[#allocation4 + $0xb8] sm:$0xf]
        %v651 = vld [vmem:[#allocation4 + $0xbc] sm:$0xf]
        %v652 = vld [vmem:[#allocation4 + $0xc0] sm:$0xf]
        %v653 = vld [vmem:[#allocation4 + $0xc4] sm:$0xf]
        %v654 = vld [vmem:[#allocation4 + $0xc8] sm:$0xf]
        %v655 = vld [vmem:[#allocation4 + $0xcc] sm:$0xf]
        %v656 = vld [vmem:[#allocation4 + $0xd0] sm:$0xf]
        %v657 = vld [vmem:[#allocation4 + $0xd4] sm:$0xf]
        %v658 = vld [vmem:[#allocation4 + $0xd8] sm:$0xf]
        %v659 = vld [vmem:[#allocation4 + $0xdc] sm:$0xf]
        %v660 = vld [vmem:[#allocation4 + $0xe0] sm:$0xf]
        %v661 = vld [vmem:[#allocation4 + $0xe4] sm:$0xf]
        %v662 = vld [vmem:[#allocation4 + $0xe8] sm:$0xf]
        %v663 = vld [vmem:[#allocation4 + $0xec] sm:$0xf]
        %v664 = vld [vmem:[#allocation4 + $0xf0] sm:$0xf]
        %v665 = vld [vmem:[#allocation4 + $0xf4] sm:$0xf]
        %v666 = vld [vmem:[#allocation4 + $0xf8] sm:$0xf]
        %v667 = vld [vmem:[#allocation4 + $0xfc] sm:$0xf]
        %v668 = vld [vmem:[%s4] sm:$0x1]
        %v670 = vperm.slane %v668, 0
        %v736 = vunpack.c.l.b16 %v604
        %v737 = vunpack.c.l.b16 %v605
        %v738 = vunpack.c.l.b16 %v606
        %v739 = vunpack.c.l.b16 %v607
        %v740 = vunpack.c.l.b16 %v608
        %v741 = vunpack.c.l.b16 %v609
        %v742 = vunpack.c.l.b16 %v610
        %v743 = vunpack.c.l.b16 %v611
        %v744 = vunpack.c.l.b16 %v612
        %v745 = vunpack.c.l.b16 %v613
        %v746 = vunpack.c.l.b16 %v614
        %v747 = vunpack.c.l.b16 %v615
        %v748 = vunpack.c.l.b16 %v616
        %v749 = vunpack.c.l.b16 %v617
        %v750 = vunpack.c.l.b16 %v618
        %v751 = vunpack.c.l.b16 %v619
        %v752 = vunpack.c.l.b16 %v620
        %v753 = vunpack.c.l.b16 %v621
        %v754 = vunpack.c.l.b16 %v622
        %v755 = vunpack.c.l.b16 %v623
        %v756 = vunpack.c.l.b16 %v624
        %v757 = vunpack.c.l.b16 %v625
        %v758 = vunpack.c.l.b16 %v626
        %v759 = vunpack.c.l.b16 %v627
        %v760 = vunpack.c.l.b16 %v628
        %v761 = vunpack.c.l.b16 %v629
        %v762 = vunpack.c.l.b16 %v630
        %v763 = vunpack.c.l.b16 %v631
        %v764 = vunpack.c.l.b16 %v632
        %v765 = vunpack.c.l.b16 %v633
        %v766 = vunpack.c.l.b16 %v634
        %v767 = vunpack.c.l.b16 %v635
        %v768 = vunpack.c.l.b16 %v636
        %v769 = vunpack.c.l.b16 %v637
        %v770 = vunpack.c.l.b16 %v638
        %v771 = vunpack.c.l.b16 %v639
        %v772 = vunpack.c.l.b16 %v640
        %v773 = vunpack.c.l.b16 %v641
        %v774 = vunpack.c.l.b16 %v642
        %v775 = vunpack.c.l.b16 %v643
        %v776 = vunpack.c.l.b16 %v644
        %v777 = vunpack.c.l.b16 %v645
        %v778 = vunpack.c.l.b16 %v646
        %v779 = vunpack.c.l.b16 %v647
        %v780 = vunpack.c.l.b16 %v648
        %v781 = vunpack.c.l.b16 %v649
        %v782 = vunpack.c.l.b16 %v650
        %v783 = vunpack.c.l.b16 %v651
        %v784 = vunpack.c.l.b16 %v652
        %v785 = vunpack.c.l.b16 %v653
        %v786 = vunpack.c.l.b16 %v654
        %v787 = vunpack.c.l.b16 %v655
        %v788 = vunpack.c.l.b16 %v656
        %v789 = vunpack.c.l.b16 %v657
        %v790 = vunpack.c.l.b16 %v658
        %v791 = vunpack.c.l.b16 %v659
        %v792 = vunpack.c.l.b16 %v660
        %v793 = vunpack.c.l.b16 %v661
        %v794 = vunpack.c.l.b16 %v662
        %v795 = vunpack.c.l.b16 %v663
        %v796 = vunpack.c.l.b16 %v664
        %v797 = vunpack.c.l.b16 %v665
        %v798 = vunpack.c.l.b16 %v666
        %v799 = vunpack.c.l.b16 %v667
        %v800 = vpack.c.b16 %v737, %v736
        %v801 = vpack.c.b16 %v739, %v738
        %v802 = vpack.c.b16 %v741, %v740
        %v803 = vpack.c.b16 %v743, %v742
        %v804 = vpack.c.b16 %v745, %v744
        %v805 = vpack.c.b16 %v747, %v746
        %v806 = vpack.c.b16 %v749, %v748
        %v807 = vpack.c.b16 %v751, %v750
        %v808 = vpack.c.b16 %v753, %v752
        %v809 = vpack.c.b16 %v755, %v754
        %v810 = vpack.c.b16 %v757, %v756
        %v811 = vpack.c.b16 %v759, %v758
        %v812 = vpack.c.b16 %v761, %v760
        %v813 = vpack.c.b16 %v763, %v762
        %v814 = vpack.c.b16 %v765, %v764
        %v815 = vpack.c.b16 %v767, %v766
        %v816 = vpack.c.b16 %v769, %v768
        %v817 = vpack.c.b16 %v771, %v770
        %v818 = vpack.c.b16 %v773, %v772
        %v819 = vpack.c.b16 %v775, %v774
        %v820 = vpack.c.b16 %v777, %v776
        %v821 = vpack.c.b16 %v779, %v778
        %v822 = vpack.c.b16 %v781, %v780
        %v823 = vpack.c.b16 %v783, %v782
        %v824 = vpack.c.b16 %v785, %v784
        %v825 = vpack.c.b16 %v787, %v786
        %v826 = vpack.c.b16 %v789, %v788
        %v827 = vpack.c.b16 %v791, %v790
        %v828 = vpack.c.b16 %v793, %v792
        %v829 = vpack.c.b16 %v795, %v794
        %v830 = vpack.c.b16 %v797, %v796
        %v831 = vpack.c.b16 %v799, %v798
        %864 = vmatpush.bf16.msra.mxu0 %v807
        %865 = vmatpush.bf16.msra.mxu0 %v806
        %866 = vmatpush.bf16.msra.mxu0 %v805
        %867 = vmatpush.bf16.msra.mxu0 %v804
        %868 = vmatpush.bf16.msra.mxu0 %v803
        %869 = vmatpush.bf16.msra.mxu0 %v802
        %870 = vmatpush.bf16.msra.mxu0 %v801
        %871 = vmatpush.bf16.msra.mxu0 %v800
        %872 = vmatmul.bf16.gmra.mxu0 %v600
        %v873 = vpop.f32.mrf.mxu0
        %v874 = vadd.f32 %v670, %v873
        %v875 = vpop.f32.mrf.mxu0
        %876 = vdwg.mxu0
        %877 = vmatpush.bf16.msra.mxu0 %v815
        %878 = vmatpush.bf16.msra.mxu0 %v814
        %879 = vmatpush.bf16.msra.mxu0 %v813
        %880 = vmatpush.bf16.msra.mxu0 %v812
        %881 = vmatpush.bf16.msra.mxu0 %v811
        %882 = vmatpush.bf16.msra.mxu0 %v810
        %883 = vmatpush.bf16.msra.mxu0 %v809
        %884 = vmatpush.bf16.msra.mxu0 %v808
        %885 = vmatmul.bf16.gmra.mxu0 %v601
        %v886 = vpop.f32.mrf.mxu0
        %v887 = vadd.f32 %v874, %v886
        %v888 = vpop.f32.mrf.mxu0
        %889 = vdwg.mxu0
        %890 = vmatpush.bf16.msra.mxu0 %v823
        %891 = vmatpush.bf16.msra.mxu0 %v822
        %892 = vmatpush.bf16.msra.mxu0 %v821
        %893 = vmatpush.bf16.msra.mxu0 %v820
        %894 = vmatpush.bf16.msra.mxu0 %v819
        %895 = vmatpush.bf16.msra.mxu0 %v818
        %896 = vmatpush.bf16.msra.mxu0 %v817
        %897 = vmatpush.bf16.msra.mxu0 %v816
        %898 = vmatmul.bf16.gmra.mxu0 %v602
        %v899 = vpop.f32.mrf.mxu0
        %v900 = vadd.f32 %v887, %v899
        %v901 = vpop.f32.mrf.mxu0
        %902 = vdwg.mxu0
        %903 = vmatpush.bf16.msra.mxu0 %v831
        %904 = vmatpush.bf16.msra.mxu0 %v830
        %905 = vmatpush.bf16.msra.mxu0 %v829
        %906 = vmatpush.bf16.msra.mxu0 %v828
        %907 = vmatpush.bf16.msra.mxu0 %v827
        %908 = vmatpush.bf16.msra.mxu0 %v826
        %909 = vmatpush.bf16.msra.mxu0 %v825
        %910 = vmatpush.bf16.msra.mxu0 %v824
        %911 = vmatmul.bf16.gmra.mxu0 %v603
        %v912 = vpop.f32.mrf.mxu0
        %v913 = vadd.f32 %v900, %v912
        %v914 = vpop.f32.mrf.mxu0
        %915 = vdwg.mxu0
        %v916 = vadd.f32 %v309, %v913
        %v917 = vpack.c.bf16 %v916, %v916
        %s918 = scalar_lea.vmem [#allocation2], 256
        %v919 = vld [vmem:[%s918] sm:$0xff]
        %v920 = vld [vmem:[%s918 + $0x8] sm:$0xff]
        %v921 = vld [vmem:[%s918 + $0x10] sm:$0xff]
        %v922 = vld [vmem:[%s918 + $0x18] sm:$0xff]
        %v923 = vld [vmem:[%s918 + $0x20] sm:$0xff]
        %v924 = vld [vmem:[%s918 + $0x28] sm:$0xff]
        %v925 = vld [vmem:[%s918 + $0x30] sm:$0xff]
        %v926 = vld [vmem:[%s918 + $0x38] sm:$0xff]
        %v927 = vld [vmem:[%s918 + $0x40] sm:$0xff]
        %v928 = vld [vmem:[%s918 + $0x48] sm:$0xff]
        %v929 = vld [vmem:[%s918 + $0x50] sm:$0xff]
        %v930 = vld [vmem:[%s918 + $0x58] sm:$0xff]
        %v931 = vld [vmem:[%s918 + $0x60] sm:$0xff]
        %v932 = vld [vmem:[%s918 + $0x68] sm:$0xff]
        %v933 = vld [vmem:[%s918 + $0x70] sm:$0xff]
        %v934 = vld [vmem:[%s918 + $0x78] sm:$0xff]
        %v935 = vld [vmem:[%s918 + $0x80] sm:$0xff]
        %v936 = vld [vmem:[%s918 + $0x88] sm:$0xff]
        %v937 = vld [vmem:[%s918 + $0x90] sm:$0xff]
        %v938 = vld [vmem:[%s918 + $0x98] sm:$0xff]
        %v939 = vld [vmem:[%s918 + $0xa0] sm:$0xff]
        %v940 = vld [vmem:[%s918 + $0xa8] sm:$0xff]
        %v941 = vld [vmem:[%s918 + $0xb0] sm:$0xff]
        %v942 = vld [vmem:[%s918 + $0xb8] sm:$0xff]
        %v943 = vld [vmem:[%s918 + $0xc0] sm:$0xff]
        %v944 = vld [vmem:[%s918 + $0xc8] sm:$0xff]
        %v945 = vld [vmem:[%s918 + $0xd0] sm:$0xff]
        %v946 = vld [vmem:[%s918 + $0xd8] sm:$0xff]
        %v947 = vld [vmem:[%s918 + $0xe0] sm:$0xff]
        %v948 = vld [vmem:[%s918 + $0xe8] sm:$0xff]
        %v949 = vld [vmem:[%s918 + $0xf0] sm:$0xff]
        %v950 = vld [vmem:[%s918 + $0xf8] sm:$0xff]
        %s951 = scalar_lea.vmem %s2, 4
        %v952 = vld [vmem:[%s951] sm:$0xf]
        %v954 = vperm.slane %v952, 0
        %v955 = vperm.slane %v952, 1
        %v956 = vperm.slane %v952, 2
        %v957 = vperm.slane %v952, 3
        %v994 = vunpack.c.l.b16 %v919
        %v995 = vunpack.c.h.b16 %v919
        %v996 = vunpack.c.l.b16 %v920
        %v997 = vunpack.c.h.b16 %v920
        %v998 = vunpack.c.l.b16 %v921
        %v999 = vunpack.c.h.b16 %v921
        %v1000 = vunpack.c.l.b16 %v922
        %v1001 = vunpack.c.h.b16 %v922
        %v1002 = vunpack.c.l.b16 %v923
        %v1003 = vunpack.c.h.b16 %v923
        %v1004 = vunpack.c.l.b16 %v924
        %v1005 = vunpack.c.h.b16 %v924
        %v1006 = vunpack.c.l.b16 %v925
        %v1007 = vunpack.c.h.b16 %v925
        %v1008 = vunpack.c.l.b16 %v926
        %v1009 = vunpack.c.h.b16 %v926
        %v1010 = vunpack.c.l.b16 %v927
        %v1011 = vunpack.c.h.b16 %v927
        %v1012 = vunpack.c.l.b16 %v928
        %v1013 = vunpack.c.h.b16 %v928
        %v1014 = vunpack.c.l.b16 %v929
        %v1015 = vunpack.c.h.b16 %v929
        %v1016 = vunpack.c.l.b16 %v930
        %v1017 = vunpack.c.h.b16 %v930
        %v1018 = vunpack.c.l.b16 %v931
        %v1019 = vunpack.c.h.b16 %v931
        %v1020 = vunpack.c.l.b16 %v932
        %v1021 = vunpack.c.h.b16 %v932
        %v1022 = vunpack.c.l.b16 %v933
        %v1023 = vunpack.c.h.b16 %v933
        %v1024 = vunpack.c.l.b16 %v934
        %v1025 = vunpack.c.h.b16 %v934
        %v1026 = vunpack.c.l.b16 %v935
        %v1027 = vunpack.c.h.b16 %v935
        %v1028 = vunpack.c.l.b16 %v936
        %v1029 = vunpack.c.h.b16 %v936
        %v1030 = vunpack.c.l.b16 %v937
        %v1031 = vunpack.c.h.b16 %v937
        %v1032 = vunpack.c.l.b16 %v938
        %v1033 = vunpack.c.h.b16 %v938
        %v1034 = vunpack.c.l.b16 %v939
        %v1035 = vunpack.c.h.b16 %v939
        %v1036 = vunpack.c.l.b16 %v940
        %v1037 = vunpack.c.h.b16 %v940
        %v1038 = vunpack.c.l.b16 %v941
        %v1039 = vunpack.c.h.b16 %v941
        %v1040 = vunpack.c.l.b16 %v942
        %v1041 = vunpack.c.h.b16 %v942
        %v1042 = vunpack.c.l.b16 %v943
        %v1043 = vunpack.c.h.b16 %v943
        %v1044 = vunpack.c.l.b16 %v944
        %v1045 = vunpack.c.h.b16 %v944
        %v1046 = vunpack.c.l.b16 %v945
        %v1047 = vunpack.c.h.b16 %v945
        %v1048 = vunpack.c.l.b16 %v946
        %v1049 = vunpack.c.h.b16 %v946
        %v1050 = vunpack.c.l.b16 %v947
        %v1051 = vunpack.c.h.b16 %v947
        %v1052 = vunpack.c.l.b16 %v948
        %v1053 = vunpack.c.h.b16 %v948
        %v1054 = vunpack.c.l.b16 %v949
        %v1055 = vunpack.c.h.b16 %v949
        %v1056 = vunpack.c.l.b16 %v950
        %v1057 = vunpack.c.h.b16 %v950
        %v1058 = vpack.c.b16 %v998, %v994
        %v1059 = vpack.c.b16 %v999, %v995
        %v1060 = vpack.c.b16 %v1000, %v996
        %v1061 = vpack.c.b16 %v1001, %v997
        %v1062 = vpack.c.b16 %v1006, %v1002
        %v1063 = vpack.c.b16 %v1007, %v1003
        %v1064 = vpack.c.b16 %v1008, %v1004
        %v1065 = vpack.c.b16 %v1009, %v1005
        %v1066 = vpack.c.b16 %v1014, %v1010
        %v1067 = vpack.c.b16 %v1015, %v1011
        %v1068 = vpack.c.b16 %v1016, %v1012
        %v1069 = vpack.c.b16 %v1017, %v1013
        %v1070 = vpack.c.b16 %v1022, %v1018
        %v1071 = vpack.c.b16 %v1023, %v1019
        %v1072 = vpack.c.b16 %v1024, %v1020
        %v1073 = vpack.c.b16 %v1025, %v1021
        %v1074 = vpack.c.b16 %v1030, %v1026
        %v1075 = vpack.c.b16 %v1031, %v1027
        %v1076 = vpack.c.b16 %v1032, %v1028
        %v1077 = vpack.c.b16 %v1033, %v1029
        %v1078 = vpack.c.b16 %v1038, %v1034
        %v1079 = vpack.c.b16 %v1039, %v1035
        %v1080 = vpack.c.b16 %v1040, %v1036
        %v1081 = vpack.c.b16 %v1041, %v1037
        %v1082 = vpack.c.b16 %v1046, %v1042
        %v1083 = vpack.c.b16 %v1047, %v1043
        %v1084 = vpack.c.b16 %v1048, %v1044
        %v1085 = vpack.c.b16 %v1049, %v1045
        %v1086 = vpack.c.b16 %v1054, %v1050
        %v1087 = vpack.c.b16 %v1055, %v1051
        %v1088 = vpack.c.b16 %v1056, %v1052
        %v1089 = vpack.c.b16 %v1057, %v1053
        %1122 = vmatpush.bf16.msra.mxu0 %v1086
        %1123 = vmatpush.bf16.msra.mxu0 %v1082
        %1124 = vmatpush.bf16.msra.mxu0 %v1078
        %1125 = vmatpush.bf16.msra.mxu0 %v1074
        %1126 = vmatpush.bf16.msra.mxu0 %v1070
        %1127 = vmatpush.bf16.msra.mxu0 %v1066
        %1128 = vmatpush.bf16.msra.mxu0 %v1062
        %1129 = vmatpush.bf16.msra.mxu0 %v1058
        %1130 = vmatmul.bf16.gmra.mxu0 %v917
        %v1131 = vpop.f32.mrf.mxu0
        %v1132 = vadd.f32 %v954, %v1131
        %v1133 = vpop.f32.mrf.mxu0
        %1134 = vdwg.mxu0
        %1135 = vmatpush.bf16.msra.mxu0 %v1087
        %1136 = vmatpush.bf16.msra.mxu0 %v1083
        %1137 = vmatpush.bf16.msra.mxu0 %v1079
        %1138 = vmatpush.bf16.msra.mxu0 %v1075
        %1139 = vmatpush.bf16.msra.mxu0 %v1071
        %1140 = vmatpush.bf16.msra.mxu0 %v1067
        %1141 = vmatpush.bf16.msra.mxu0 %v1063
        %1142 = vmatpush.bf16.msra.mxu0 %v1059
        %1143 = vmatmul.bf16.gmra.mxu0 %v917
        %v1144 = vpop.f32.mrf.mxu0
        %v1145 = vadd.f32 %v955, %v1144
        %v1146 = vpop.f32.mrf.mxu0
        %1147 = vdwg.mxu0
        %1148 = vmatpush.bf16.msra.mxu0 %v1088
        %1149 = vmatpush.bf16.msra.mxu0 %v1084
        %1150 = vmatpush.bf16.msra.mxu0 %v1080
        %1151 = vmatpush.bf16.msra.mxu0 %v1076
        %1152 = vmatpush.bf16.msra.mxu0 %v1072
        %1153 = vmatpush.bf16.msra.mxu0 %v1068
        %1154 = vmatpush.bf16.msra.mxu0 %v1064
        %1155 = vmatpush.bf16.msra.mxu0 %v1060
        %1156 = vmatmul.bf16.gmra.mxu0 %v917
        %v1157 = vpop.f32.mrf.mxu0
        %v1158 = vadd.f32 %v956, %v1157
        %v1159 = vpop.f32.mrf.mxu0
        %1160 = vdwg.mxu0
        %1161 = vmatpush.bf16.msra.mxu0 %v1089
        %1162 = vmatpush.bf16.msra.mxu0 %v1085
        %1163 = vmatpush.bf16.msra.mxu0 %v1081
        %1164 = vmatpush.bf16.msra.mxu0 %v1077
        %1165 = vmatpush.bf16.msra.mxu0 %v1073
        %1166 = vmatpush.bf16.msra.mxu0 %v1069
        %1167 = vmatpush.bf16.msra.mxu0 %v1065
        %1168 = vmatpush.bf16.msra.mxu0 %v1061
        %1169 = vmatmul.bf16.gmra.mxu0 %v917
        %v1170 = vpop.f32.mrf.mxu0
        %v1171 = vadd.f32 %v957, %v1170
        %v1172 = vpop.f32.mrf.mxu0
        %1173 = vdwg.mxu0
        %v1174 = vmul.f32 %v1132, 0.5
        %v1175 = vmul.f32 %v1145, 0.5
        %v1176 = vmul.f32 %v1158, 0.5
        %v1177 = vmul.f32 %v1171, 0.5
        %v1178 = vmul.f32 %v1132, 0.044715
        %v1179 = vmul.f32 %v1145, 0.044715
        %v1180 = vmul.f32 %v1158, 0.044715
        %v1181 = vmul.f32 %v1171, 0.044715
        %v1182 = vmul.f32 %v1178, %v1132
        %v1183 = vmul.f32 %v1179, %v1145
        %v1184 = vmul.f32 %v1180, %v1158
        %v1185 = vmul.f32 %v1181, %v1171
        %v1186 = vmul.f32 %v1182, %v1132
        %v1187 = vmul.f32 %v1183, %v1145
        %v1188 = vmul.f32 %v1184, %v1158
        %v1189 = vmul.f32 %v1185, %v1171
        %v1190 = vadd.f32 %v1132, %v1186
        %v1191 = vadd.f32 %v1145, %v1187
        %v1192 = vadd.f32 %v1158, %v1188
        %v1193 = vadd.f32 %v1171, %v1189
        %v1194 = vmul.f32 %v1190, 0.7978846
        %v1195 = vmul.f32 %v1191, 0.7978846
        %v1196 = vmul.f32 %v1192, 0.7978846
        %v1197 = vmul.f32 %v1193, 0.7978846
        %v1198 = vtanh.pop %v1194
        %v1199 = vtanh.pop %v1195
        %v1200 = vtanh.pop %v1196
        %v1201 = vtanh.pop %v1197
        %v1202 = vadd.f32 %v1198, 1.0
        %v1203 = vadd.f32 %v1199, 1.0
        %v1204 = vadd.f32 %v1200, 1.0
        %v1205 = vadd.f32 %v1201, 1.0
        %v1206 = vmul.f32 %v1174, %v1202
        %v1207 = vmul.f32 %v1175, %v1203
        %v1208 = vmul.f32 %v1176, %v1204
        %v1209 = vmul.f32 %v1177, %v1205
        %v1210 = vpack.c.bf16 %v1206, %v1206
        %v1211 = vpack.c.bf16 %v1207, %v1207
        %v1212 = vpack.c.bf16 %v1208, %v1208
        %v1213 = vpack.c.bf16 %v1209, %v1209
        %s1214 = scalar_lea.vmem [#allocation4], 256
        %v1215 = vld [vmem:[%s1214] sm:$0xf]
        %v1216 = vld [vmem:[%s1214 + $0x4] sm:$0xf]
        %v1217 = vld [vmem:[%s1214 + $0x8] sm:$0xf]
        %v1218 = vld [vmem:[%s1214 + $0xc] sm:$0xf]
        %v1219 = vld [vmem:[%s1214 + $0x10] sm:$0xf]
        %v1220 = vld [vmem:[%s1214 + $0x14] sm:$0xf]
        %v1221 = vld [vmem:[%s1214 + $0x18] sm:$0xf]
        %v1222 = vld [vmem:[%s1214 + $0x1c] sm:$0xf]
        %v1223 = vld [vmem:[%s1214 + $0x20] sm:$0xf]
        %v1224 = vld [vmem:[%s1214 + $0x24] sm:$0xf]
        %v1225 = vld [vmem:[%s1214 + $0x28] sm:$0xf]
        %v1226 = vld [vmem:[%s1214 + $0x2c] sm:$0xf]
        %v1227 = vld [vmem:[%s1214 + $0x30] sm:$0xf]
        %v1228 = vld [vmem:[%s1214 + $0x34] sm:$0xf]
        %v1229 = vld [vmem:[%s1214 + $0x38] sm:$0xf]
        %v1230 = vld [vmem:[%s1214 + $0x3c] sm:$0xf]
        %v1231 = vld [vmem:[%s1214 + $0x40] sm:$0xf]
        %v1232 = vld [vmem:[%s1214 + $0x44] sm:$0xf]
        %v1233 = vld [vmem:[%s1214 + $0x48] sm:$0xf]
        %v1234 = vld [vmem:[%s1214 + $0x4c] sm:$0xf]
        %v1235 = vld [vmem:[%s1214 + $0x50] sm:$0xf]
        %v1236 = vld [vmem:[%s1214 + $0x54] sm:$0xf]
        %v1237 = vld [vmem:[%s1214 + $0x58] sm:$0xf]
        %v1238 = vld [vmem:[%s1214 + $0x5c] sm:$0xf]
        %v1239 = vld [vmem:[%s1214 + $0x60] sm:$0xf]
        %v1240 = vld [vmem:[%s1214 + $0x64] sm:$0xf]
        %v1241 = vld [vmem:[%s1214 + $0x68] sm:$0xf]
        %v1242 = vld [vmem:[%s1214 + $0x6c] sm:$0xf]
        %v1243 = vld [vmem:[%s1214 + $0x70] sm:$0xf]
        %v1244 = vld [vmem:[%s1214 + $0x74] sm:$0xf]
        %v1245 = vld [vmem:[%s1214 + $0x78] sm:$0xf]
        %v1246 = vld [vmem:[%s1214 + $0x7c] sm:$0xf]
        %v1247 = vld [vmem:[%s1214 + $0x80] sm:$0xf]
        %v1248 = vld [vmem:[%s1214 + $0x84] sm:$0xf]
        %v1249 = vld [vmem:[%s1214 + $0x88] sm:$0xf]
        %v1250 = vld [vmem:[%s1214 + $0x8c] sm:$0xf]
        %v1251 = vld [vmem:[%s1214 + $0x90] sm:$0xf]
        %v1252 = vld [vmem:[%s1214 + $0x94] sm:$0xf]
        %v1253 = vld [vmem:[%s1214 + $0x98] sm:$0xf]
        %v1254 = vld [vmem:[%s1214 + $0x9c] sm:$0xf]
        %v1255 = vld [vmem:[%s1214 + $0xa0] sm:$0xf]
        %v1256 = vld [vmem:[%s1214 + $0xa4] sm:$0xf]
        %v1257 = vld [vmem:[%s1214 + $0xa8] sm:$0xf]
        %v1258 = vld [vmem:[%s1214 + $0xac] sm:$0xf]
        %v1259 = vld [vmem:[%s1214 + $0xb0] sm:$0xf]
        %v1260 = vld [vmem:[%s1214 + $0xb4] sm:$0xf]
        %v1261 = vld [vmem:[%s1214 + $0xb8] sm:$0xf]
        %v1262 = vld [vmem:[%s1214 + $0xbc] sm:$0xf]
        %v1263 = vld [vmem:[%s1214 + $0xc0] sm:$0xf]
        %v1264 = vld [vmem:[%s1214 + $0xc4] sm:$0xf]
        %v1265 = vld [vmem:[%s1214 + $0xc8] sm:$0xf]
        %v1266 = vld [vmem:[%s1214 + $0xcc] sm:$0xf]
        %v1267 = vld [vmem:[%s1214 + $0xd0] sm:$0xf]
        %v1268 = vld [vmem:[%s1214 + $0xd4] sm:$0xf]
        %v1269 = vld [vmem:[%s1214 + $0xd8] sm:$0xf]
        %v1270 = vld [vmem:[%s1214 + $0xdc] sm:$0xf]
        %v1271 = vld [vmem:[%s1214 + $0xe0] sm:$0xf]
        %v1272 = vld [vmem:[%s1214 + $0xe4] sm:$0xf]
        %v1273 = vld [vmem:[%s1214 + $0xe8] sm:$0xf]
        %v1274 = vld [vmem:[%s1214 + $0xec] sm:$0xf]
        %v1275 = vld [vmem:[%s1214 + $0xf0] sm:$0xf]
        %v1276 = vld [vmem:[%s1214 + $0xf4] sm:$0xf]
        %v1277 = vld [vmem:[%s1214 + $0xf8] sm:$0xf]
        %v1278 = vld [vmem:[%s1214 + $0xfc] sm:$0xf]
        %s1279 = scalar_lea.vmem %s4, 1
        %v1280 = vld [vmem:[%s1279] sm:$0x1]
        %v1282 = vperm.slane %v1280, 0
        %v1348 = vunpack.c.l.b16 %v1215
        %v1349 = vunpack.c.l.b16 %v1216
        %v1350 = vunpack.c.l.b16 %v1217
        %v1351 = vunpack.c.l.b16 %v1218
        %v1352 = vunpack.c.l.b16 %v1219
        %v1353 = vunpack.c.l.b16 %v1220
        %v1354 = vunpack.c.l.b16 %v1221
        %v1355 = vunpack.c.l.b16 %v1222
        %v1356 = vunpack.c.l.b16 %v1223
        %v1357 = vunpack.c.l.b16 %v1224
        %v1358 = vunpack.c.l.b16 %v1225
        %v1359 = vunpack.c.l.b16 %v1226
        %v1360 = vunpack.c.l.b16 %v1227
        %v1361 = vunpack.c.l.b16 %v1228
        %v1362 = vunpack.c.l.b16 %v1229
        %v1363 = vunpack.c.l.b16 %v1230
        %v1364 = vunpack.c.l.b16 %v1231
        %v1365 = vunpack.c.l.b16 %v1232
        %v1366 = vunpack.c.l.b16 %v1233
        %v1367 = vunpack.c.l.b16 %v1234
        %v1368 = vunpack.c.l.b16 %v1235
        %v1369 = vunpack.c.l.b16 %v1236
        %v1370 = vunpack.c.l.b16 %v1237
        %v1371 = vunpack.c.l.b16 %v1238
        %v1372 = vunpack.c.l.b16 %v1239
        %v1373 = vunpack.c.l.b16 %v1240
        %v1374 = vunpack.c.l.b16 %v1241
        %v1375 = vunpack.c.l.b16 %v1242
        %v1376 = vunpack.c.l.b16 %v1243
        %v1377 = vunpack.c.l.b16 %v1244
        %v1378 = vunpack.c.l.b16 %v1245
        %v1379 = vunpack.c.l.b16 %v1246
        %v1380 = vunpack.c.l.b16 %v1247
        %v1381 = vunpack.c.l.b16 %v1248
        %v1382 = vunpack.c.l.b16 %v1249
        %v1383 = vunpack.c.l.b16 %v1250
        %v1384 = vunpack.c.l.b16 %v1251
        %v1385 = vunpack.c.l.b16 %v1252
        %v1386 = vunpack.c.l.b16 %v1253
        %v1387 = vunpack.c.l.b16 %v1254
        %v1388 = vunpack.c.l.b16 %v1255
        %v1389 = vunpack.c.l.b16 %v1256
        %v1390 = vunpack.c.l.b16 %v1257
        %v1391 = vunpack.c.l.b16 %v1258
        %v1392 = vunpack.c.l.b16 %v1259
        %v1393 = vunpack.c.l.b16 %v1260
        %v1394 = vunpack.c.l.b16 %v1261
        %v1395 = vunpack.c.l.b16 %v1262
        %v1396 = vunpack.c.l.b16 %v1263
        %v1397 = vunpack.c.l.b16 %v1264
        %v1398 = vunpack.c.l.b16 %v1265
        %v1399 = vunpack.c.l.b16 %v1266
        %v1400 = vunpack.c.l.b16 %v1267
        %v1401 = vunpack.c.l.b16 %v1268
        %v1402 = vunpack.c.l.b16 %v1269
        %v1403 = vunpack.c.l.b16 %v1270
        %v1404 = vunpack.c.l.b16 %v1271
        %v1405 = vunpack.c.l.b16 %v1272
        %v1406 = vunpack.c.l.b16 %v1273
        %v1407 = vunpack.c.l.b16 %v1274
        %v1408 = vunpack.c.l.b16 %v1275
        %v1409 = vunpack.c.l.b16 %v1276
        %v1410 = vunpack.c.l.b16 %v1277
        %v1411 = vunpack.c.l.b16 %v1278
        %v1412 = vpack.c.b16 %v1349, %v1348
        %v1413 = vpack.c.b16 %v1351, %v1350
        %v1414 = vpack.c.b16 %v1353, %v1352
        %v1415 = vpack.c.b16 %v1355, %v1354
        %v1416 = vpack.c.b16 %v1357, %v1356
        %v1417 = vpack.c.b16 %v1359, %v1358
        %v1418 = vpack.c.b16 %v1361, %v1360
        %v1419 = vpack.c.b16 %v1363, %v1362
        %v1420 = vpack.c.b16 %v1365, %v1364
        %v1421 = vpack.c.b16 %v1367, %v1366
        %v1422 = vpack.c.b16 %v1369, %v1368
        %v1423 = vpack.c.b16 %v1371, %v1370
        %v1424 = vpack.c.b16 %v1373, %v1372
        %v1425 = vpack.c.b16 %v1375, %v1374
        %v1426 = vpack.c.b16 %v1377, %v1376
        %v1427 = vpack.c.b16 %v1379, %v1378
        %v1428 = vpack.c.b16 %v1381, %v1380
        %v1429 = vpack.c.b16 %v1383, %v1382
        %v1430 = vpack.c.b16 %v1385, %v1384
        %v1431 = vpack.c.b16 %v1387, %v1386
        %v1432 = vpack.c.b16 %v1389, %v1388
        %v1433 = vpack.c.b16 %v1391, %v1390
        %v1434 = vpack.c.b16 %v1393, %v1392
        %v1435 = vpack.c.b16 %v1395, %v1394
        %v1436 = vpack.c.b16 %v1397, %v1396
        %v1437 = vpack.c.b16 %v1399, %v1398
        %v1438 = vpack.c.b16 %v1401, %v1400
        %v1439 = vpack.c.b16 %v1403, %v1402
        %v1440 = vpack.c.b16 %v1405, %v1404
        %v1441 = vpack.c.b16 %v1407, %v1406
        %v1442 = vpack.c.b16 %v1409, %v1408
        %v1443 = vpack.c.b16 %v1411, %v1410
        %1476 = vmatpush.bf16.msra.mxu0 %v1419
        %1477 = vmatpush.bf16.msra.mxu0 %v1418
        %1478 = vmatpush.bf16.msra.mxu0 %v1417
        %1479 = vmatpush.bf16.msra.mxu0 %v1416
        %1480 = vmatpush.bf16.msra.mxu0 %v1415
        %1481 = vmatpush.bf16.msra.mxu0 %v1414
        %1482 = vmatpush.bf16.msra.mxu0 %v1413
        %1483 = vmatpush.bf16.msra.mxu0 %v1412
        %1484 = vmatmul.bf16.gmra.mxu0 %v1210
        %v1485 = vpop.f32.mrf.mxu0
        %v1486 = vadd.f32 %v1282, %v1485
        %v1487 = vpop.f32.mrf.mxu0
        %1488 = vdwg.mxu0
        %1489 = vmatpush.bf16.msra.mxu0 %v1427
        %1490 = vmatpush.bf16.msra.mxu0 %v1426
        %1491 = vmatpush.bf16.msra.mxu0 %v1425
        %1492 = vmatpush.bf16.msra.mxu0 %v1424
        %1493 = vmatpush.bf16.msra.mxu0 %v1423
        %1494 = vmatpush.bf16.msra.mxu0 %v1422
        %1495 = vmatpush.bf16.msra.mxu0 %v1421
        %1496 = vmatpush.bf16.msra.mxu0 %v1420
        %1497 = vmatmul.bf16.gmra.mxu0 %v1211
        %v1498 = vpop.f32.mrf.mxu0
        %v1499 = vadd.f32 %v1486, %v1498
        %v1500 = vpop.f32.mrf.mxu0
        %1501 = vdwg.mxu0
        %1502 = vmatpush.bf16.msra.mxu0 %v1435
        %1503 = vmatpush.bf16.msra.mxu0 %v1434
        %1504 = vmatpush.bf16.msra.mxu0 %v1433
        %1505 = vmatpush.bf16.msra.mxu0 %v1432
        %1506 = vmatpush.bf16.msra.mxu0 %v1431
        %1507 = vmatpush.bf16.msra.mxu0 %v1430
        %1508 = vmatpush.bf16.msra.mxu0 %v1429
        %1509 = vmatpush.bf16.msra.mxu0 %v1428
        %1510 = vmatmul.bf16.gmra.mxu0 %v1212
        %v1511 = vpop.f32.mrf.mxu0
        %v1512 = vadd.f32 %v1499, %v1511
        %v1513 = vpop.f32.mrf.mxu0
        %1514 = vdwg.mxu0
        %1515 = vmatpush.bf16.msra.mxu0 %v1443
        %1516 = vmatpush.bf16.msra.mxu0 %v1442
        %1517 = vmatpush.bf16.msra.mxu0 %v1441
        %1518 = vmatpush.bf16.msra.mxu0 %v1440
        %1519 = vmatpush.bf16.msra.mxu0 %v1439
        %1520 = vmatpush.bf16.msra.mxu0 %v1438
        %1521 = vmatpush.bf16.msra.mxu0 %v1437
        %1522 = vmatpush.bf16.msra.mxu0 %v1436
        %1523 = vmatmul.bf16.gmra.mxu0 %v1213
        %v1524 = vpop.f32.mrf.mxu0
        %v1525 = vadd.f32 %v1512, %v1524
        %v1526 = vpop.f32.mrf.mxu0
        %1527 = vdwg.mxu0
        %v1528 = vadd.f32 %v916, %v1525
        %v1529 = vpack.c.bf16 %v1528, %v1528
        %s1530 = scalar_lea.vmem [#allocation2], 512
        %v1531 = vld [vmem:[%s1530] sm:$0xff]
        %v1532 = vld [vmem:[%s1530 + $0x8] sm:$0xff]
        %v1533 = vld [vmem:[%s1530 + $0x10] sm:$0xff]
        %v1534 = vld [vmem:[%s1530 + $0x18] sm:$0xff]
        %v1535 = vld [vmem:[%s1530 + $0x20] sm:$0xff]
        %v1536 = vld [vmem:[%s1530 + $0x28] sm:$0xff]
        %v1537 = vld [vmem:[%s1530 + $0x30] sm:$0xff]
        %v1538 = vld [vmem:[%s1530 + $0x38] sm:$0xff]
        %v1539 = vld [vmem:[%s1530 + $0x40] sm:$0xff]
        %v1540 = vld [vmem:[%s1530 + $0x48] sm:$0xff]
        %v1541 = vld [vmem:[%s1530 + $0x50] sm:$0xff]
        %v1542 = vld [vmem:[%s1530 + $0x58] sm:$0xff]
        %v1543 = vld [vmem:[%s1530 + $0x60] sm:$0xff]
        %v1544 = vld [vmem:[%s1530 + $0x68] sm:$0xff]
        %v1545 = vld [vmem:[%s1530 + $0x70] sm:$0xff]
        %v1546 = vld [vmem:[%s1530 + $0x78] sm:$0xff]
        %v1547 = vld [vmem:[%s1530 + $0x80] sm:$0xff]
        %v1548 = vld [vmem:[%s1530 + $0x88] sm:$0xff]
        %v1549 = vld [vmem:[%s1530 + $0x90] sm:$0xff]
        %v1550 = vld [vmem:[%s1530 + $0x98] sm:$0xff]
        %v1551 = vld [vmem:[%s1530 + $0xa0] sm:$0xff]
        %v1552 = vld [vmem:[%s1530 + $0xa8] sm:$0xff]
        %v1553 = vld [vmem:[%s1530 + $0xb0] sm:$0xff]
        %v1554 = vld [vmem:[%s1530 + $0xb8] sm:$0xff]
        %v1555 = vld [vmem:[%s1530 + $0xc0] sm:$0xff]
        %v1556 = vld [vmem:[%s1530 + $0xc8] sm:$0xff]
        %v1557 = vld [vmem:[%s1530 + $0xd0] sm:$0xff]
        %v1558 = vld [vmem:[%s1530 + $0xd8] sm:$0xff]
        %v1559 = vld [vmem:[%s1530 + $0xe0] sm:$0xff]
        %v1560 = vld [vmem:[%s1530 + $0xe8] sm:$0xff]
        %v1561 = vld [vmem:[%s1530 + $0xf0] sm:$0xff]
        %v1562 = vld [vmem:[%s1530 + $0xf8] sm:$0xff]
        %s1563 = scalar_lea.vmem %s2, 8
        %v1564 = vld [vmem:[%s1563] sm:$0xf]
        %v1566 = vperm.slane %v1564, 0
        %v1567 = vperm.slane %v1564, 1
        %v1568 = vperm.slane %v1564, 2
        %v1569 = vperm.slane %v1564, 3
        %v1606 = vunpack.c.l.b16 %v1531
        %v1607 = vunpack.c.h.b16 %v1531
        %v1608 = vunpack.c.l.b16 %v1532
        %v1609 = vunpack.c.h.b16 %v1532
        %v1610 = vunpack.c.l.b16 %v1533
        %v1611 = vunpack.c.h.b16 %v1533
        %v1612 = vunpack.c.l.b16 %v1534
        %v1613 = vunpack.c.h.b16 %v1534
        %v1614 = vunpack.c.l.b16 %v1535
        %v1615 = vunpack.c.h.b16 %v1535
        %v1616 = vunpack.c.l.b16 %v1536
        %v1617 = vunpack.c.h.b16 %v1536
        %v1618 = vunpack.c.l.b16 %v1537
        %v1619 = vunpack.c.h.b16 %v1537
        %v1620 = vunpack.c.l.b16 %v1538
        %v1621 = vunpack.c.h.b16 %v1538
        %v1622 = vunpack.c.l.b16 %v1539
        %v1623 = vunpack.c.h.b16 %v1539
        %v1624 = vunpack.c.l.b16 %v1540
        %v1625 = vunpack.c.h.b16 %v1540
        %v1626 = vunpack.c.l.b16 %v1541
        %v1627 = vunpack.c.h.b16 %v1541
        %v1628 = vunpack.c.l.b16 %v1542
        %v1629 = vunpack.c.h.b16 %v1542
        %v1630 = vunpack.c.l.b16 %v1543
        %v1631 = vunpack.c.h.b16 %v1543
        %v1632 = vunpack.c.l.b16 %v1544
        %v1633 = vunpack.c.h.b16 %v1544
        %v1634 = vunpack.c.l.b16 %v1545
        %v1635 = vunpack.c.h.b16 %v1545
        %v1636 = vunpack.c.l.b16 %v1546
        %v1637 = vunpack.c.h.b16 %v1546
        %v1638 = vunpack.c.l.b16 %v1547
        %v1639 = vunpack.c.h.b16 %v1547
        %v1640 = vunpack.c.l.b16 %v1548
        %v1641 = vunpack.c.h.b16 %v1548
        %v1642 = vunpack.c.l.b16 %v1549
        %v1643 = vunpack.c.h.b16 %v1549
        %v1644 = vunpack.c.l.b16 %v1550
        %v1645 = vunpack.c.h.b16 %v1550
        %v1646 = vunpack.c.l.b16 %v1551
        %v1647 = vunpack.c.h.b16 %v1551
        %v1648 = vunpack.c.l.b16 %v1552
        %v1649 = vunpack.c.h.b16 %v1552
        %v1650 = vunpack.c.l.b16 %v1553
        %v1651 = vunpack.c.h.b16 %v1553
        %v1652 = vunpack.c.l.b16 %v1554
        %v1653 = vunpack.c.h.b16 %v1554
        %v1654 = vunpack.c.l.b16 %v1555
        %v1655 = vunpack.c.h.b16 %v1555
        %v1656 = vunpack.c.l.b16 %v1556
        %v1657 = vunpack.c.h.b16 %v1556
        %v1658 = vunpack.c.l.b16 %v1557
        %v1659 = vunpack.c.h.b16 %v1557
        %v1660 = vunpack.c.l.b16 %v1558
        %v1661 = vunpack.c.h.b16 %v1558
        %v1662 = vunpack.c.l.b16 %v1559
        %v1663 = vunpack.c.h.b16 %v1559
        %v1664 = vunpack.c.l.b16 %v1560
        %v1665 = vunpack.c.h.b16 %v1560
        %v1666 = vunpack.c.l.b16 %v1561
        %v1667 = vunpack.c.h.b16 %v1561
        %v1668 = vunpack.c.l.b16 %v1562
        %v1669 = vunpack.c.h.b16 %v1562
        %v1670 = vpack.c.b16 %v1610, %v1606
        %v1671 = vpack.c.b16 %v1611, %v1607
        %v1672 = vpack.c.b16 %v1612, %v1608
        %v1673 = vpack.c.b16 %v1613, %v1609
        %v1674 = vpack.c.b16 %v1618, %v1614
        %v1675 = vpack.c.b16 %v1619, %v1615
        %v1676 = vpack.c.b16 %v1620, %v1616
        %v1677 = vpack.c.b16 %v1621, %v1617
        %v1678 = vpack.c.b16 %v1626, %v1622
        %v1679 = vpack.c.b16 %v1627, %v1623
        %v1680 = vpack.c.b16 %v1628, %v1624
        %v1681 = vpack.c.b16 %v1629, %v1625
        %v1682 = vpack.c.b16 %v1634, %v1630
        %v1683 = vpack.c.b16 %v1635, %v1631
        %v1684 = vpack.c.b16 %v1636, %v1632
        %v1685 = vpack.c.b16 %v1637, %v1633
        %v1686 = vpack.c.b16 %v1642, %v1638
        %v1687 = vpack.c.b16 %v1643, %v1639
        %v1688 = vpack.c.b16 %v1644, %v1640
        %v1689 = vpack.c.b16 %v1645, %v1641
        %v1690 = vpack.c.b16 %v1650, %v1646
        %v1691 = vpack.c.b16 %v1651, %v1647
        %v1692 = vpack.c.b16 %v1652, %v1648
        %v1693 = vpack.c.b16 %v1653, %v1649
        %v1694 = vpack.c.b16 %v1658, %v1654
        %v1695 = vpack.c.b16 %v1659, %v1655
        %v1696 = vpack.c.b16 %v1660, %v1656
        %v1697 = vpack.c.b16 %v1661, %v1657
        %v1698 = vpack.c.b16 %v1666, %v1662
        %v1699 = vpack.c.b16 %v1667, %v1663
        %v1700 = vpack.c.b16 %v1668, %v1664
        %v1701 = vpack.c.b16 %v1669, %v1665
        %1734 = vmatpush.bf16.msra.mxu0 %v1698
        %1735 = vmatpush.bf16.msra.mxu0 %v1694
        %1736 = vmatpush.bf16.msra.mxu0 %v1690
        %1737 = vmatpush.bf16.msra.mxu0 %v1686
        %1738 = vmatpush.bf16.msra.mxu0 %v1682
        %1739 = vmatpush.bf16.msra.mxu0 %v1678
        %1740 = vmatpush.bf16.msra.mxu0 %v1674
        %1741 = vmatpush.bf16.msra.mxu0 %v1670
        %1742 = vmatmul.bf16.gmra.mxu0 %v1529
        %v1743 = vpop.f32.mrf.mxu0
        %v1744 = vadd.f32 %v1566, %v1743
        %v1745 = vpop.f32.mrf.mxu0
        %1746 = vdwg.mxu0
        %1747 = vmatpush.bf16.msra.mxu0 %v1699
        %1748 = vmatpush.bf16.msra.mxu0 %v1695
        %1749 = vmatpush.bf16.msra.mxu0 %v1691
        %1750 = vmatpush.bf16.msra.mxu0 %v1687
        %1751 = vmatpush.bf16.msra.mxu0 %v1683
        %1752 = vmatpush.bf16.msra.mxu0 %v1679
        %1753 = vmatpush.bf16.msra.mxu0 %v1675
        %1754 = vmatpush.bf16.msra.mxu0 %v1671
        %1755 = vmatmul.bf16.gmra.mxu0 %v1529
        %v1756 = vpop.f32.mrf.mxu0
        %v1757 = vadd.f32 %v1567, %v1756
        %v1758 = vpop.f32.mrf.mxu0
        %1759 = vdwg.mxu0
        %1760 = vmatpush.bf16.msra.mxu0 %v1700
        %1761 = vmatpush.bf16.msra.mxu0 %v1696
        %1762 = vmatpush.bf16.msra.mxu0 %v1692
        %1763 = vmatpush.bf16.msra.mxu0 %v1688
        %1764 = vmatpush.bf16.msra.mxu0 %v1684
        %1765 = vmatpush.bf16.msra.mxu0 %v1680
        %1766 = vmatpush.bf16.msra.mxu0 %v1676
        %1767 = vmatpush.bf16.msra.mxu0 %v1672
        %1768 = vmatmul.bf16.gmra.mxu0 %v1529
        %v1769 = vpop.f32.mrf.mxu0
        %v1770 = vadd.f32 %v1568, %v1769
        %v1771 = vpop.f32.mrf.mxu0
        %1772 = vdwg.mxu0
        %1773 = vmatpush.bf16.msra.mxu0 %v1701
        %1774 = vmatpush.bf16.msra.mxu0 %v1697
        %1775 = vmatpush.bf16.msra.mxu0 %v1693
        %1776 = vmatpush.bf16.msra.mxu0 %v1689
        %1777 = vmatpush.bf16.msra.mxu0 %v1685
        %1778 = vmatpush.bf16.msra.mxu0 %v1681
        %1779 = vmatpush.bf16.msra.mxu0 %v1677
        %1780 = vmatpush.bf16.msra.mxu0 %v1673
        %1781 = vmatmul.bf16.gmra.mxu0 %v1529
        %v1782 = vpop.f32.mrf.mxu0
        %v1783 = vadd.f32 %v1569, %v1782
        %v1784 = vpop.f32.mrf.mxu0
        %1785 = vdwg.mxu0
        %v1786 = vmul.f32 %v1744, 0.5
        %v1787 = vmul.f32 %v1757, 0.5
        %v1788 = vmul.f32 %v1770, 0.5
        %v1789 = vmul.f32 %v1783, 0.5
        %v1790 = vmul.f32 %v1744, 0.044715
        %v1791 = vmul.f32 %v1757, 0.044715
        %v1792 = vmul.f32 %v1770, 0.044715
        %v1793 = vmul.f32 %v1783, 0.044715
        %v1794 = vmul.f32 %v1790, %v1744
        %v1795 = vmul.f32 %v1791, %v1757
        %v1796 = vmul.f32 %v1792, %v1770
        %v1797 = vmul.f32 %v1793, %v1783
        %v1798 = vmul.f32 %v1794, %v1744
        %v1799 = vmul.f32 %v1795, %v1757
        %v1800 = vmul.f32 %v1796, %v1770
        %v1801 = vmul.f32 %v1797, %v1783
        %v1802 = vadd.f32 %v1744, %v1798
        %v1803 = vadd.f32 %v1757, %v1799
        %v1804 = vadd.f32 %v1770, %v1800
        %v1805 = vadd.f32 %v1783, %v1801
        %v1806 = vmul.f32 %v1802, 0.7978846
        %v1807 = vmul.f32 %v1803, 0.7978846
        %v1808 = vmul.f32 %v1804, 0.7978846
        %v1809 = vmul.f32 %v1805, 0.7978846
        %v1810 = vtanh.pop %v1806
        %v1811 = vtanh.pop %v1807
        %v1812 = vtanh.pop %v1808
        %v1813 = vtanh.pop %v1809
        %v1814 = vadd.f32 %v1810, 1.0
        %v1815 = vadd.f32 %v1811, 1.0
        %v1816 = vadd.f32 %v1812, 1.0
        %v1817 = vadd.f32 %v1813, 1.0
        %v1818 = vmul.f32 %v1786, %v1814
        %v1819 = vmul.f32 %v1787, %v1815
        %v1820 = vmul.f32 %v1788, %v1816
        %v1821 = vmul.f32 %v1789, %v1817
        %v1822 = vpack.c.bf16 %v1818, %v1818
        %v1823 = vpack.c.bf16 %v1819, %v1819
        %v1824 = vpack.c.bf16 %v1820, %v1820
        %v1825 = vpack.c.bf16 %v1821, %v1821
        %s1826 = scalar_lea.vmem [#allocation4], 512
        %v1827 = vld [vmem:[%s1826] sm:$0xf]
        %v1828 = vld [vmem:[%s1826 + $0x4] sm:$0xf]
        %v1829 = vld [vmem:[%s1826 + $0x8] sm:$0xf]
        %v1830 = vld [vmem:[%s1826 + $0xc] sm:$0xf]
        %v1831 = vld [vmem:[%s1826 + $0x10] sm:$0xf]
        %v1832 = vld [vmem:[%s1826 + $0x14] sm:$0xf]
        %v1833 = vld [vmem:[%s1826 + $0x18] sm:$0xf]
        %v1834 = vld [vmem:[%s1826 + $0x1c] sm:$0xf]
        %v1835 = vld [vmem:[%s1826 + $0x20] sm:$0xf]
        %v1836 = vld [vmem:[%s1826 + $0x24] sm:$0xf]
        %v1837 = vld [vmem:[%s1826 + $0x28] sm:$0xf]
        %v1838 = vld [vmem:[%s1826 + $0x2c] sm:$0xf]
        %v1839 = vld [vmem:[%s1826 + $0x30] sm:$0xf]
        %v1840 = vld [vmem:[%s1826 + $0x34] sm:$0xf]
        %v1841 = vld [vmem:[%s1826 + $0x38] sm:$0xf]
        %v1842 = vld [vmem:[%s1826 + $0x3c] sm:$0xf]
        %v1843 = vld [vmem:[%s1826 + $0x40] sm:$0xf]
        %v1844 = vld [vmem:[%s1826 + $0x44] sm:$0xf]
        %v1845 = vld [vmem:[%s1826 + $0x48] sm:$0xf]
        %v1846 = vld [vmem:[%s1826 + $0x4c] sm:$0xf]
        %v1847 = vld [vmem:[%s1826 + $0x50] sm:$0xf]
        %v1848 = vld [vmem:[%s1826 + $0x54] sm:$0xf]
        %v1849 = vld [vmem:[%s1826 + $0x58] sm:$0xf]
        %v1850 = vld [vmem:[%s1826 + $0x5c] sm:$0xf]
        %v1851 = vld [vmem:[%s1826 + $0x60] sm:$0xf]
        %v1852 = vld [vmem:[%s1826 + $0x64] sm:$0xf]
        %v1853 = vld [vmem:[%s1826 + $0x68] sm:$0xf]
        %v1854 = vld [vmem:[%s1826 + $0x6c] sm:$0xf]
        %v1855 = vld [vmem:[%s1826 + $0x70] sm:$0xf]
        %v1856 = vld [vmem:[%s1826 + $0x74] sm:$0xf]
        %v1857 = vld [vmem:[%s1826 + $0x78] sm:$0xf]
        %v1858 = vld [vmem:[%s1826 + $0x7c] sm:$0xf]
        %v1859 = vld [vmem:[%s1826 + $0x80] sm:$0xf]
        %v1860 = vld [vmem:[%s1826 + $0x84] sm:$0xf]
        %v1861 = vld [vmem:[%s1826 + $0x88] sm:$0xf]
        %v1862 = vld [vmem:[%s1826 + $0x8c] sm:$0xf]
        %v1863 = vld [vmem:[%s1826 + $0x90] sm:$0xf]
        %v1864 = vld [vmem:[%s1826 + $0x94] sm:$0xf]
        %v1865 = vld [vmem:[%s1826 + $0x98] sm:$0xf]
        %v1866 = vld [vmem:[%s1826 + $0x9c] sm:$0xf]
        %v1867 = vld [vmem:[%s1826 + $0xa0] sm:$0xf]
        %v1868 = vld [vmem:[%s1826 + $0xa4] sm:$0xf]
        %v1869 = vld [vmem:[%s1826 + $0xa8] sm:$0xf]
        %v1870 = vld [vmem:[%s1826 + $0xac] sm:$0xf]
        %v1871 = vld [vmem:[%s1826 + $0xb0] sm:$0xf]
        %v1872 = vld [vmem:[%s1826 + $0xb4] sm:$0xf]
        %v1873 = vld [vmem:[%s1826 + $0xb8] sm:$0xf]
        %v1874 = vld [vmem:[%s1826 + $0xbc] sm:$0xf]
        %v1875 = vld [vmem:[%s1826 + $0xc0] sm:$0xf]
        %v1876 = vld [vmem:[%s1826 + $0xc4] sm:$0xf]
        %v1877 = vld [vmem:[%s1826 + $0xc8] sm:$0xf]
        %v1878 = vld [vmem:[%s1826 + $0xcc] sm:$0xf]
        %v1879 = vld [vmem:[%s1826 + $0xd0] sm:$0xf]
        %v1880 = vld [vmem:[%s1826 + $0xd4] sm:$0xf]
        %v1881 = vld [vmem:[%s1826 + $0xd8] sm:$0xf]
        %v1882 = vld [vmem:[%s1826 + $0xdc] sm:$0xf]
        %v1883 = vld [vmem:[%s1826 + $0xe0] sm:$0xf]
        %v1884 = vld [vmem:[%s1826 + $0xe4] sm:$0xf]
        %v1885 = vld [vmem:[%s1826 + $0xe8] sm:$0xf]
        %v1886 = vld [vmem:[%s1826 + $0xec] sm:$0xf]
        %v1887 = vld [vmem:[%s1826 + $0xf0] sm:$0xf]
        %v1888 = vld [vmem:[%s1826 + $0xf4] sm:$0xf]
        %v1889 = vld [vmem:[%s1826 + $0xf8] sm:$0xf]
        %v1890 = vld [vmem:[%s1826 + $0xfc] sm:$0xf]
        %s1891 = scalar_lea.vmem %s4, 2
        %v1892 = vld [vmem:[%s1891] sm:$0x1]
        %v1894 = vperm.slane %v1892, 0
        %v1960 = vunpack.c.l.b16 %v1827
        %v1961 = vunpack.c.l.b16 %v1828
        %v1962 = vunpack.c.l.b16 %v1829
        %v1963 = vunpack.c.l.b16 %v1830
        %v1964 = vunpack.c.l.b16 %v1831
        %v1965 = vunpack.c.l.b16 %v1832
        %v1966 = vunpack.c.l.b16 %v1833
        %v1967 = vunpack.c.l.b16 %v1834
        %v1968 = vunpack.c.l.b16 %v1835
        %v1969 = vunpack.c.l.b16 %v1836
        %v1970 = vunpack.c.l.b16 %v1837
        %v1971 = vunpack.c.l.b16 %v1838
        %v1972 = vunpack.c.l.b16 %v1839
        %v1973 = vunpack.c.l.b16 %v1840
        %v1974 = vunpack.c.l.b16 %v1841
        %v1975 = vunpack.c.l.b16 %v1842
        %v1976 = vunpack.c.l.b16 %v1843
        %v1977 = vunpack.c.l.b16 %v1844
        %v1978 = vunpack.c.l.b16 %v1845
        %v1979 = vunpack.c.l.b16 %v1846
        %v1980 = vunpack.c.l.b16 %v1847
        %v1981 = vunpack.c.l.b16 %v1848
        %v1982 = vunpack.c.l.b16 %v1849
        %v1983 = vunpack.c.l.b16 %v1850
        %v1984 = vunpack.c.l.b16 %v1851
        %v1985 = vunpack.c.l.b16 %v1852
        %v1986 = vunpack.c.l.b16 %v1853
        %v1987 = vunpack.c.l.b16 %v1854
        %v1988 = vunpack.c.l.b16 %v1855
        %v1989 = vunpack.c.l.b16 %v1856
        %v1990 = vunpack.c.l.b16 %v1857
        %v1991 = vunpack.c.l.b16 %v1858
        %v1992 = vunpack.c.l.b16 %v1859
        %v1993 = vunpack.c.l.b16 %v1860
        %v1994 = vunpack.c.l.b16 %v1861
        %v1995 = vunpack.c.l.b16 %v1862
        %v1996 = vunpack.c.l.b16 %v1863
        %v1997 = vunpack.c.l.b16 %v1864
        %v1998 = vunpack.c.l.b16 %v1865
        %v1999 = vunpack.c.l.b16 %v1866
        %v2000 = vunpack.c.l.b16 %v1867
        %v2001 = vunpack.c.l.b16 %v1868
        %v2002 = vunpack.c.l.b16 %v1869
        %v2003 = vunpack.c.l.b16 %v1870
        %v2004 = vunpack.c.l.b16 %v1871
        %v2005 = vunpack.c.l.b16 %v1872
        %v2006 = vunpack.c.l.b16 %v1873
        %v2007 = vunpack.c.l.b16 %v1874
        %v2008 = vunpack.c.l.b16 %v1875
        %v2009 = vunpack.c.l.b16 %v1876
        %v2010 = vunpack.c.l.b16 %v1877
        %v2011 = vunpack.c.l.b16 %v1878
        %v2012 = vunpack.c.l.b16 %v1879
        %v2013 = vunpack.c.l.b16 %v1880
        %v2014 = vunpack.c.l.b16 %v1881
        %v2015 = vunpack.c.l.b16 %v1882
        %v2016 = vunpack.c.l.b16 %v1883
        %v2017 = vunpack.c.l.b16 %v1884
        %v2018 = vunpack.c.l.b16 %v1885
        %v2019 = vunpack.c.l.b16 %v1886
        %v2020 = vunpack.c.l.b16 %v1887
        %v2021 = vunpack.c.l.b16 %v1888
        %v2022 = vunpack.c.l.b16 %v1889
        %v2023 = vunpack.c.l.b16 %v1890
        %v2024 = vpack.c.b16 %v1961, %v1960
        %v2025 = vpack.c.b16 %v1963, %v1962
        %v2026 = vpack.c.b16 %v1965, %v1964
        %v2027 = vpack.c.b16 %v1967, %v1966
        %v2028 = vpack.c.b16 %v1969, %v1968
        %v2029 = vpack.c.b16 %v1971, %v1970
        %v2030 = vpack.c.b16 %v1973, %v1972
        %v2031 = vpack.c.b16 %v1975, %v1974
        %v2032 = vpack.c.b16 %v1977, %v1976
        %v2033 = vpack.c.b16 %v1979, %v1978
        %v2034 = vpack.c.b16 %v1981, %v1980
        %v2035 = vpack.c.b16 %v1983, %v1982
        %v2036 = vpack.c.b16 %v1985, %v1984
        %v2037 = vpack.c.b16 %v1987, %v1986
        %v2038 = vpack.c.b16 %v1989, %v1988
        %v2039 = vpack.c.b16 %v1991, %v1990
        %v2040 = vpack.c.b16 %v1993, %v1992
        %v2041 = vpack.c.b16 %v1995, %v1994
        %v2042 = vpack.c.b16 %v1997, %v1996
        %v2043 = vpack.c.b16 %v1999, %v1998
        %v2044 = vpack.c.b16 %v2001, %v2000
        %v2045 = vpack.c.b16 %v2003, %v2002
        %v2046 = vpack.c.b16 %v2005, %v2004
        %v2047 = vpack.c.b16 %v2007, %v2006
        %v2048 = vpack.c.b16 %v2009, %v2008
        %v2049 = vpack.c.b16 %v2011, %v2010
        %v2050 = vpack.c.b16 %v2013, %v2012
        %v2051 = vpack.c.b16 %v2015, %v2014
        %v2052 = vpack.c.b16 %v2017, %v2016
        %v2053 = vpack.c.b16 %v2019, %v2018
        %v2054 = vpack.c.b16 %v2021, %v2020
        %v2055 = vpack.c.b16 %v2023, %v2022
        %2088 = vmatpush.bf16.msra.mxu0 %v2031
        %2089 = vmatpush.bf16.msra.mxu0 %v2030
        %2090 = vmatpush.bf16.msra.mxu0 %v2029
        %2091 = vmatpush.bf16.msra.mxu0 %v2028
        %2092 = vmatpush.bf16.msra.mxu0 %v2027
        %2093 = vmatpush.bf16.msra.mxu0 %v2026
        %2094 = vmatpush.bf16.msra.mxu0 %v2025
        %2095 = vmatpush.bf16.msra.mxu0 %v2024
        %2096 = vmatmul.bf16.gmra.mxu0 %v1822
        %v2097 = vpop.f32.mrf.mxu0
        %v2098 = vadd.f32 %v1894, %v2097
        %v2099 = vpop.f32.mrf.mxu0
        %2100 = vdwg.mxu0
        %2101 = vmatpush.bf16.msra.mxu0 %v2039
        %2102 = vmatpush.bf16.msra.mxu0 %v2038
        %2103 = vmatpush.bf16.msra.mxu0 %v2037
        %2104 = vmatpush.bf16.msra.mxu0 %v2036
        %2105 = vmatpush.bf16.msra.mxu0 %v2035
        %2106 = vmatpush.bf16.msra.mxu0 %v2034
        %2107 = vmatpush.bf16.msra.mxu0 %v2033
        %2108 = vmatpush.bf16.msra.mxu0 %v2032
        %2109 = vmatmul.bf16.gmra.mxu0 %v1823
        %v2110 = vpop.f32.mrf.mxu0
        %v2111 = vadd.f32 %v2098, %v2110
        %v2112 = vpop.f32.mrf.mxu0
        %2113 = vdwg.mxu0
        %2114 = vmatpush.bf16.msra.mxu0 %v2047
        %2115 = vmatpush.bf16.msra.mxu0 %v2046
        %2116 = vmatpush.bf16.msra.mxu0 %v2045
        %2117 = vmatpush.bf16.msra.mxu0 %v2044
        %2118 = vmatpush.bf16.msra.mxu0 %v2043
        %2119 = vmatpush.bf16.msra.mxu0 %v2042
        %2120 = vmatpush.bf16.msra.mxu0 %v2041
        %2121 = vmatpush.bf16.msra.mxu0 %v2040
        %2122 = vmatmul.bf16.gmra.mxu0 %v1824
        %v2123 = vpop.f32.mrf.mxu0
        %v2124 = vadd.f32 %v2111, %v2123
        %v2125 = vpop.f32.mrf.mxu0
        %2126 = vdwg.mxu0
        %2127 = vmatpush.bf16.msra.mxu0 %v2055
        %2128 = vmatpush.bf16.msra.mxu0 %v2054
        %2129 = vmatpush.bf16.msra.mxu0 %v2053
        %2130 = vmatpush.bf16.msra.mxu0 %v2052
        %2131 = vmatpush.bf16.msra.mxu0 %v2051
        %2132 = vmatpush.bf16.msra.mxu0 %v2050
        %2133 = vmatpush.bf16.msra.mxu0 %v2049
        %2134 = vmatpush.bf16.msra.mxu0 %v2048
        %2135 = vmatmul.bf16.gmra.mxu0 %v1825
        %v2136 = vpop.f32.mrf.mxu0
        %v2137 = vadd.f32 %v2124, %v2136
        %v2138 = vpop.f32.mrf.mxu0
        %2139 = vdwg.mxu0
        %v2140 = vadd.f32 %v1528, %v2137
        %v2141 = vpack.c.bf16 %v2140, %v2140
        %s2142 = scalar_lea.vmem [#allocation2], 768
        %v2143 = vld [vmem:[%s2142] sm:$0xff]
        %v2144 = vld [vmem:[%s2142 + $0x8] sm:$0xff]
        %v2145 = vld [vmem:[%s2142 + $0x10] sm:$0xff]
        %v2146 = vld [vmem:[%s2142 + $0x18] sm:$0xff]
        %v2147 = vld [vmem:[%s2142 + $0x20] sm:$0xff]
        %v2148 = vld [vmem:[%s2142 + $0x28] sm:$0xff]
        %v2149 = vld [vmem:[%s2142 + $0x30] sm:$0xff]
        %v2150 = vld [vmem:[%s2142 + $0x38] sm:$0xff]
        %v2151 = vld [vmem:[%s2142 + $0x40] sm:$0xff]
        %v2152 = vld [vmem:[%s2142 + $0x48] sm:$0xff]
        %v2153 = vld [vmem:[%s2142 + $0x50] sm:$0xff]
        %v2154 = vld [vmem:[%s2142 + $0x58] sm:$0xff]
        %v2155 = vld [vmem:[%s2142 + $0x60] sm:$0xff]
        %v2156 = vld [vmem:[%s2142 + $0x68] sm:$0xff]
        %v2157 = vld [vmem:[%s2142 + $0x70] sm:$0xff]
        %v2158 = vld [vmem:[%s2142 + $0x78] sm:$0xff]
        %v2159 = vld [vmem:[%s2142 + $0x80] sm:$0xff]
        %v2160 = vld [vmem:[%s2142 + $0x88] sm:$0xff]
        %v2161 = vld [vmem:[%s2142 + $0x90] sm:$0xff]
        %v2162 = vld [vmem:[%s2142 + $0x98] sm:$0xff]
        %v2163 = vld [vmem:[%s2142 + $0xa0] sm:$0xff]
        %v2164 = vld [vmem:[%s2142 + $0xa8] sm:$0xff]
        %v2165 = vld [vmem:[%s2142 + $0xb0] sm:$0xff]
        %v2166 = vld [vmem:[%s2142 + $0xb8] sm:$0xff]
        %v2167 = vld [vmem:[%s2142 + $0xc0] sm:$0xff]
        %v2168 = vld [vmem:[%s2142 + $0xc8] sm:$0xff]
        %v2169 = vld [vmem:[%s2142 + $0xd0] sm:$0xff]
        %v2170 = vld [vmem:[%s2142 + $0xd8] sm:$0xff]
        %v2171 = vld [vmem:[%s2142 + $0xe0] sm:$0xff]
        %v2172 = vld [vmem:[%s2142 + $0xe8] sm:$0xff]
        %v2173 = vld [vmem:[%s2142 + $0xf0] sm:$0xff]
        %v2174 = vld [vmem:[%s2142 + $0xf8] sm:$0xff]
        %s2175 = scalar_lea.vmem %s2, 12
        %v2176 = vld [vmem:[%s2175] sm:$0xf]
        %v2178 = vperm.slane %v2176, 0
        %v2179 = vperm.slane %v2176, 1
        %v2180 = vperm.slane %v2176, 2
        %v2181 = vperm.slane %v2176, 3
        %v2218 = vunpack.c.l.b16 %v2143
        %v2219 = vunpack.c.h.b16 %v2143
        %v2220 = vunpack.c.l.b16 %v2144
        %v2221 = vunpack.c.h.b16 %v2144
        %v2222 = vunpack.c.l.b16 %v2145
        %v2223 = vunpack.c.h.b16 %v2145
        %v2224 = vunpack.c.l.b16 %v2146
        %v2225 = vunpack.c.h.b16 %v2146
        %v2226 = vunpack.c.l.b16 %v2147
        %v2227 = vunpack.c.h.b16 %v2147
        %v2228 = vunpack.c.l.b16 %v2148
        %v2229 = vunpack.c.h.b16 %v2148
        %v2230 = vunpack.c.l.b16 %v2149
        %v2231 = vunpack.c.h.b16 %v2149
        %v2232 = vunpack.c.l.b16 %v2150
        %v2233 = vunpack.c.h.b16 %v2150
        %v2234 = vunpack.c.l.b16 %v2151
        %v2235 = vunpack.c.h.b16 %v2151
        %v2236 = vunpack.c.l.b16 %v2152
        %v2237 = vunpack.c.h.b16 %v2152
        %v2238 = vunpack.c.l.b16 %v2153
        %v2239 = vunpack.c.h.b16 %v2153
        %v2240 = vunpack.c.l.b16 %v2154
        %v2241 = vunpack.c.h.b16 %v2154
        %v2242 = vunpack.c.l.b16 %v2155
        %v2243 = vunpack.c.h.b16 %v2155
        %v2244 = vunpack.c.l.b16 %v2156
        %v2245 = vunpack.c.h.b16 %v2156
        %v2246 = vunpack.c.l.b16 %v2157
        %v2247 = vunpack.c.h.b16 %v2157
        %v2248 = vunpack.c.l.b16 %v2158
        %v2249 = vunpack.c.h.b16 %v2158
        %v2250 = vunpack.c.l.b16 %v2159
        %v2251 = vunpack.c.h.b16 %v2159
        %v2252 = vunpack.c.l.b16 %v2160
        %v2253 = vunpack.c.h.b16 %v2160
        %v2254 = vunpack.c.l.b16 %v2161
        %v2255 = vunpack.c.h.b16 %v2161
        %v2256 = vunpack.c.l.b16 %v2162
        %v2257 = vunpack.c.h.b16 %v2162
        %v2258 = vunpack.c.l.b16 %v2163
        %v2259 = vunpack.c.h.b16 %v2163
        %v2260 = vunpack.c.l.b16 %v2164
        %v2261 = vunpack.c.h.b16 %v2164
        %v2262 = vunpack.c.l.b16 %v2165
        %v2263 = vunpack.c.h.b16 %v2165
        %v2264 = vunpack.c.l.b16 %v2166
        %v2265 = vunpack.c.h.b16 %v2166
        %v2266 = vunpack.c.l.b16 %v2167
        %v2267 = vunpack.c.h.b16 %v2167
        %v2268 = vunpack.c.l.b16 %v2168
        %v2269 = vunpack.c.h.b16 %v2168
        %v2270 = vunpack.c.l.b16 %v2169
        %v2271 = vunpack.c.h.b16 %v2169
        %v2272 = vunpack.c.l.b16 %v2170
        %v2273 = vunpack.c.h.b16 %v2170
        %v2274 = vunpack.c.l.b16 %v2171
        %v2275 = vunpack.c.h.b16 %v2171
        %v2276 = vunpack.c.l.b16 %v2172
        %v2277 = vunpack.c.h.b16 %v2172
        %v2278 = vunpack.c.l.b16 %v2173
        %v2279 = vunpack.c.h.b16 %v2173
        %v2280 = vunpack.c.l.b16 %v2174
        %v2281 = vunpack.c.h.b16 %v2174
        %v2282 = vpack.c.b16 %v2222, %v2218
        %v2283 = vpack.c.b16 %v2223, %v2219
        %v2284 = vpack.c.b16 %v2224, %v2220
        %v2285 = vpack.c.b16 %v2225, %v2221
        %v2286 = vpack.c.b16 %v2230, %v2226
        %v2287 = vpack.c.b16 %v2231, %v2227
        %v2288 = vpack.c.b16 %v2232, %v2228
        %v2289 = vpack.c.b16 %v2233, %v2229
        %v2290 = vpack.c.b16 %v2238, %v2234
        %v2291 = vpack.c.b16 %v2239, %v2235
        %v2292 = vpack.c.b16 %v2240, %v2236
        %v2293 = vpack.c.b16 %v2241, %v2237
        %v2294 = vpack.c.b16 %v2246, %v2242
        %v2295 = vpack.c.b16 %v2247, %v2243
        %v2296 = vpack.c.b16 %v2248, %v2244
        %v2297 = vpack.c.b16 %v2249, %v2245
        %v2298 = vpack.c.b16 %v2254, %v2250
        %v2299 = vpack.c.b16 %v2255, %v2251
        %v2300 = vpack.c.b16 %v2256, %v2252
        %v2301 = vpack.c.b16 %v2257, %v2253
        %v2302 = vpack.c.b16 %v2262, %v2258
        %v2303 = vpack.c.b16 %v2263, %v2259
        %v2304 = vpack.c.b16 %v2264, %v2260
        %v2305 = vpack.c.b16 %v2265, %v2261
        %v2306 = vpack.c.b16 %v2270, %v2266
        %v2307 = vpack.c.b16 %v2271, %v2267
        %v2308 = vpack.c.b16 %v2272, %v2268
        %v2309 = vpack.c.b16 %v2273, %v2269
        %v2310 = vpack.c.b16 %v2278, %v2274
        %v2311 = vpack.c.b16 %v2279, %v2275
        %v2312 = vpack.c.b16 %v2280, %v2276
        %v2313 = vpack.c.b16 %v2281, %v2277
        %2346 = vmatpush.bf16.msra.mxu0 %v2310
        %2347 = vmatpush.bf16.msra.mxu0 %v2306
        %2348 = vmatpush.bf16.msra.mxu0 %v2302
        %2349 = vmatpush.bf16.msra.mxu0 %v2298
        %2350 = vmatpush.bf16.msra.mxu0 %v2294
        %2351 = vmatpush.bf16.msra.mxu0 %v2290
        %2352 = vmatpush.bf16.msra.mxu0 %v2286
        %2353 = vmatpush.bf16.msra.mxu0 %v2282
        %2354 = vmatmul.bf16.gmra.mxu0 %v2141
        %v2355 = vpop.f32.mrf.mxu0
        %v2356 = vadd.f32 %v2178, %v2355
        %v2357 = vpop.f32.mrf.mxu0
        %2358 = vdwg.mxu0
        %2359 = vmatpush.bf16.msra.mxu0 %v2311
        %2360 = vmatpush.bf16.msra.mxu0 %v2307
        %2361 = vmatpush.bf16.msra.mxu0 %v2303
        %2362 = vmatpush.bf16.msra.mxu0 %v2299
        %2363 = vmatpush.bf16.msra.mxu0 %v2295
        %2364 = vmatpush.bf16.msra.mxu0 %v2291
        %2365 = vmatpush.bf16.msra.mxu0 %v2287
        %2366 = vmatpush.bf16.msra.mxu0 %v2283
        %2367 = vmatmul.bf16.gmra.mxu0 %v2141
        %v2368 = vpop.f32.mrf.mxu0
        %v2369 = vadd.f32 %v2179, %v2368
        %v2370 = vpop.f32.mrf.mxu0
        %2371 = vdwg.mxu0
        %2372 = vmatpush.bf16.msra.mxu0 %v2312
        %2373 = vmatpush.bf16.msra.mxu0 %v2308
        %2374 = vmatpush.bf16.msra.mxu0 %v2304
        %2375 = vmatpush.bf16.msra.mxu0 %v2300
        %2376 = vmatpush.bf16.msra.mxu0 %v2296
        %2377 = vmatpush.bf16.msra.mxu0 %v2292
        %2378 = vmatpush.bf16.msra.mxu0 %v2288
        %2379 = vmatpush.bf16.msra.mxu0 %v2284
        %2380 = vmatmul.bf16.gmra.mxu0 %v2141
        %v2381 = vpop.f32.mrf.mxu0
        %v2382 = vadd.f32 %v2180, %v2381
        %v2383 = vpop.f32.mrf.mxu0
        %2384 = vdwg.mxu0
        %2385 = vmatpush.bf16.msra.mxu0 %v2313
        %2386 = vmatpush.bf16.msra.mxu0 %v2309
        %2387 = vmatpush.bf16.msra.mxu0 %v2305
        %2388 = vmatpush.bf16.msra.mxu0 %v2301
        %2389 = vmatpush.bf16.msra.mxu0 %v2297
        %2390 = vmatpush.bf16.msra.mxu0 %v2293
        %2391 = vmatpush.bf16.msra.mxu0 %v2289
        %2392 = vmatpush.bf16.msra.mxu0 %v2285
        %2393 = vmatmul.bf16.gmra.mxu0 %v2141
        %v2394 = vpop.f32.mrf.mxu0
        %v2395 = vadd.f32 %v2181, %v2394
        %v2396 = vpop.f32.mrf.mxu0
        %2397 = vdwg.mxu0
        %v2398 = vmul.f32 %v2356, 0.5
        %v2399 = vmul.f32 %v2369, 0.5
        %v2400 = vmul.f32 %v2382, 0.5
        %v2401 = vmul.f32 %v2395, 0.5
        %v2402 = vmul.f32 %v2356, 0.044715
        %v2403 = vmul.f32 %v2369, 0.044715
        %v2404 = vmul.f32 %v2382, 0.044715
        %v2405 = vmul.f32 %v2395, 0.044715
        %v2406 = vmul.f32 %v2402, %v2356
        %v2407 = vmul.f32 %v2403, %v2369
        %v2408 = vmul.f32 %v2404, %v2382
        %v2409 = vmul.f32 %v2405, %v2395
        %v2410 = vmul.f32 %v2406, %v2356
        %v2411 = vmul.f32 %v2407, %v2369
        %v2412 = vmul.f32 %v2408, %v2382
        %v2413 = vmul.f32 %v2409, %v2395
        %v2414 = vadd.f32 %v2356, %v2410
        %v2415 = vadd.f32 %v2369, %v2411
        %v2416 = vadd.f32 %v2382, %v2412
        %v2417 = vadd.f32 %v2395, %v2413
        %v2418 = vmul.f32 %v2414, 0.7978846
        %v2419 = vmul.f32 %v2415, 0.7978846
        %v2420 = vmul.f32 %v2416, 0.7978846
        %v2421 = vmul.f32 %v2417, 0.7978846
        %v2422 = vtanh.pop %v2418
        %v2423 = vtanh.pop %v2419
        %v2424 = vtanh.pop %v2420
        %v2425 = vtanh.pop %v2421
        %v2426 = vadd.f32 %v2422, 1.0
        %v2427 = vadd.f32 %v2423, 1.0
        %v2428 = vadd.f32 %v2424, 1.0
        %v2429 = vadd.f32 %v2425, 1.0
        %v2430 = vmul.f32 %v2398, %v2426
        %v2431 = vmul.f32 %v2399, %v2427
        %v2432 = vmul.f32 %v2400, %v2428
        %v2433 = vmul.f32 %v2401, %v2429
        %v2434 = vpack.c.bf16 %v2430, %v2430
        %v2435 = vpack.c.bf16 %v2431, %v2431
        %v2436 = vpack.c.bf16 %v2432, %v2432
        %v2437 = vpack.c.bf16 %v2433, %v2433
        %s2438 = scalar_lea.vmem [#allocation4], 768
        %v2439 = vld [vmem:[%s2438] sm:$0xf]
        %v2440 = vld [vmem:[%s2438 + $0x4] sm:$0xf]
        %v2441 = vld [vmem:[%s2438 + $0x8] sm:$0xf]
        %v2442 = vld [vmem:[%s2438 + $0xc] sm:$0xf]
        %v2443 = vld [vmem:[%s2438 + $0x10] sm:$0xf]
        %v2444 = vld [vmem:[%s2438 + $0x14] sm:$0xf]
        %v2445 = vld [vmem:[%s2438 + $0x18] sm:$0xf]
        %v2446 = vld [vmem:[%s2438 + $0x1c] sm:$0xf]
        %v2447 = vld [vmem:[%s2438 + $0x20] sm:$0xf]
        %v2448 = vld [vmem:[%s2438 + $0x24] sm:$0xf]
        %v2449 = vld [vmem:[%s2438 + $0x28] sm:$0xf]
        %v2450 = vld [vmem:[%s2438 + $0x2c] sm:$0xf]
        %v2451 = vld [vmem:[%s2438 + $0x30] sm:$0xf]
        %v2452 = vld [vmem:[%s2438 + $0x34] sm:$0xf]
        %v2453 = vld [vmem:[%s2438 + $0x38] sm:$0xf]
        %v2454 = vld [vmem:[%s2438 + $0x3c] sm:$0xf]
        %v2455 = vld [vmem:[%s2438 + $0x40] sm:$0xf]
        %v2456 = vld [vmem:[%s2438 + $0x44] sm:$0xf]
        %v2457 = vld [vmem:[%s2438 + $0x48] sm:$0xf]
        %v2458 = vld [vmem:[%s2438 + $0x4c] sm:$0xf]
        %v2459 = vld [vmem:[%s2438 + $0x50] sm:$0xf]
        %v2460 = vld [vmem:[%s2438 + $0x54] sm:$0xf]
        %v2461 = vld [vmem:[%s2438 + $0x58] sm:$0xf]
        %v2462 = vld [vmem:[%s2438 + $0x5c] sm:$0xf]
        %v2463 = vld [vmem:[%s2438 + $0x60] sm:$0xf]
        %v2464 = vld [vmem:[%s2438 + $0x64] sm:$0xf]
        %v2465 = vld [vmem:[%s2438 + $0x68] sm:$0xf]
        %v2466 = vld [vmem:[%s2438 + $0x6c] sm:$0xf]
        %v2467 = vld [vmem:[%s2438 + $0x70] sm:$0xf]
        %v2468 = vld [vmem:[%s2438 + $0x74] sm:$0xf]
        %v2469 = vld [vmem:[%s2438 + $0x78] sm:$0xf]
        %v2470 = vld [vmem:[%s2438 + $0x7c] sm:$0xf]
        %v2471 = vld [vmem:[%s2438 + $0x80] sm:$0xf]
        %v2472 = vld [vmem:[%s2438 + $0x84] sm:$0xf]
        %v2473 = vld [vmem:[%s2438 + $0x88] sm:$0xf]
        %v2474 = vld [vmem:[%s2438 + $0x8c] sm:$0xf]
        %v2475 = vld [vmem:[%s2438 + $0x90] sm:$0xf]
        %v2476 = vld [vmem:[%s2438 + $0x94] sm:$0xf]
        %v2477 = vld [vmem:[%s2438 + $0x98] sm:$0xf]
        %v2478 = vld [vmem:[%s2438 + $0x9c] sm:$0xf]
        %v2479 = vld [vmem:[%s2438 + $0xa0] sm:$0xf]
        %v2480 = vld [vmem:[%s2438 + $0xa4] sm:$0xf]
        %v2481 = vld [vmem:[%s2438 + $0xa8] sm:$0xf]
        %v2482 = vld [vmem:[%s2438 + $0xac] sm:$0xf]
        %v2483 = vld [vmem:[%s2438 + $0xb0] sm:$0xf]
        %v2484 = vld [vmem:[%s2438 + $0xb4] sm:$0xf]
        %v2485 = vld [vmem:[%s2438 + $0xb8] sm:$0xf]
        %v2486 = vld [vmem:[%s2438 + $0xbc] sm:$0xf]
        %v2487 = vld [vmem:[%s2438 + $0xc0] sm:$0xf]
        %v2488 = vld [vmem:[%s2438 + $0xc4] sm:$0xf]
        %v2489 = vld [vmem:[%s2438 + $0xc8] sm:$0xf]
        %v2490 = vld [vmem:[%s2438 + $0xcc] sm:$0xf]
        %v2491 = vld [vmem:[%s2438 + $0xd0] sm:$0xf]
        %v2492 = vld [vmem:[%s2438 + $0xd4] sm:$0xf]
        %v2493 = vld [vmem:[%s2438 + $0xd8] sm:$0xf]
        %v2494 = vld [vmem:[%s2438 + $0xdc] sm:$0xf]
        %v2495 = vld [vmem:[%s2438 + $0xe0] sm:$0xf]
        %v2496 = vld [vmem:[%s2438 + $0xe4] sm:$0xf]
        %v2497 = vld [vmem:[%s2438 + $0xe8] sm:$0xf]
        %v2498 = vld [vmem:[%s2438 + $0xec] sm:$0xf]
        %v2499 = vld [vmem:[%s2438 + $0xf0] sm:$0xf]
        %v2500 = vld [vmem:[%s2438 + $0xf4] sm:$0xf]
        %v2501 = vld [vmem:[%s2438 + $0xf8] sm:$0xf]
        %v2502 = vld [vmem:[%s2438 + $0xfc] sm:$0xf]
        %s2503 = scalar_lea.vmem %s4, 3
        %v2504 = vld [vmem:[%s2503] sm:$0x1]
        %v2506 = vperm.slane %v2504, 0
        %v2572 = vunpack.c.l.b16 %v2439
        %v2573 = vunpack.c.l.b16 %v2440
        %v2574 = vunpack.c.l.b16 %v2441
        %v2575 = vunpack.c.l.b16 %v2442
        %v2576 = vunpack.c.l.b16 %v2443
        %v2577 = vunpack.c.l.b16 %v2444
        %v2578 = vunpack.c.l.b16 %v2445
        %v2579 = vunpack.c.l.b16 %v2446
        %v2580 = vunpack.c.l.b16 %v2447
        %v2581 = vunpack.c.l.b16 %v2448
        %v2582 = vunpack.c.l.b16 %v2449
        %v2583 = vunpack.c.l.b16 %v2450
        %v2584 = vunpack.c.l.b16 %v2451
        %v2585 = vunpack.c.l.b16 %v2452
        %v2586 = vunpack.c.l.b16 %v2453
        %v2587 = vunpack.c.l.b16 %v2454
        %v2588 = vunpack.c.l.b16 %v2455
        %v2589 = vunpack.c.l.b16 %v2456
        %v2590 = vunpack.c.l.b16 %v2457
        %v2591 = vunpack.c.l.b16 %v2458
        %v2592 = vunpack.c.l.b16 %v2459
        %v2593 = vunpack.c.l.b16 %v2460
        %v2594 = vunpack.c.l.b16 %v2461
        %v2595 = vunpack.c.l.b16 %v2462
        %v2596 = vunpack.c.l.b16 %v2463
        %v2597 = vunpack.c.l.b16 %v2464
        %v2598 = vunpack.c.l.b16 %v2465
        %v2599 = vunpack.c.l.b16 %v2466
        %v2600 = vunpack.c.l.b16 %v2467
        %v2601 = vunpack.c.l.b16 %v2468
        %v2602 = vunpack.c.l.b16 %v2469
        %v2603 = vunpack.c.l.b16 %v2470
        %v2604 = vunpack.c.l.b16 %v2471
        %v2605 = vunpack.c.l.b16 %v2472
        %v2606 = vunpack.c.l.b16 %v2473
        %v2607 = vunpack.c.l.b16 %v2474
        %v2608 = vunpack.c.l.b16 %v2475
        %v2609 = vunpack.c.l.b16 %v2476
        %v2610 = vunpack.c.l.b16 %v2477
        %v2611 = vunpack.c.l.b16 %v2478
        %v2612 = vunpack.c.l.b16 %v2479
        %v2613 = vunpack.c.l.b16 %v2480
        %v2614 = vunpack.c.l.b16 %v2481
        %v2615 = vunpack.c.l.b16 %v2482
        %v2616 = vunpack.c.l.b16 %v2483
        %v2617 = vunpack.c.l.b16 %v2484
        %v2618 = vunpack.c.l.b16 %v2485
        %v2619 = vunpack.c.l.b16 %v2486
        %v2620 = vunpack.c.l.b16 %v2487
        %v2621 = vunpack.c.l.b16 %v2488
        %v2622 = vunpack.c.l.b16 %v2489
        %v2623 = vunpack.c.l.b16 %v2490
        %v2624 = vunpack.c.l.b16 %v2491
        %v2625 = vunpack.c.l.b16 %v2492
        %v2626 = vunpack.c.l.b16 %v2493
        %v2627 = vunpack.c.l.b16 %v2494
        %v2628 = vunpack.c.l.b16 %v2495
        %v2629 = vunpack.c.l.b16 %v2496
        %v2630 = vunpack.c.l.b16 %v2497
        %v2631 = vunpack.c.l.b16 %v2498
        %v2632 = vunpack.c.l.b16 %v2499
        %v2633 = vunpack.c.l.b16 %v2500
        %v2634 = vunpack.c.l.b16 %v2501
        %v2635 = vunpack.c.l.b16 %v2502
        %v2636 = vpack.c.b16 %v2573, %v2572
        %v2637 = vpack.c.b16 %v2575, %v2574
        %v2638 = vpack.c.b16 %v2577, %v2576
        %v2639 = vpack.c.b16 %v2579, %v2578
        %v2640 = vpack.c.b16 %v2581, %v2580
        %v2641 = vpack.c.b16 %v2583, %v2582
        %v2642 = vpack.c.b16 %v2585, %v2584
        %v2643 = vpack.c.b16 %v2587, %v2586
        %v2644 = vpack.c.b16 %v2589, %v2588
        %v2645 = vpack.c.b16 %v2591, %v2590
        %v2646 = vpack.c.b16 %v2593, %v2592
        %v2647 = vpack.c.b16 %v2595, %v2594
        %v2648 = vpack.c.b16 %v2597, %v2596
        %v2649 = vpack.c.b16 %v2599, %v2598
        %v2650 = vpack.c.b16 %v2601, %v2600
        %v2651 = vpack.c.b16 %v2603, %v2602
        %v2652 = vpack.c.b16 %v2605, %v2604
        %v2653 = vpack.c.b16 %v2607, %v2606
        %v2654 = vpack.c.b16 %v2609, %v2608
        %v2655 = vpack.c.b16 %v2611, %v2610
        %v2656 = vpack.c.b16 %v2613, %v2612
        %v2657 = vpack.c.b16 %v2615, %v2614
        %v2658 = vpack.c.b16 %v2617, %v2616
        %v2659 = vpack.c.b16 %v2619, %v2618
        %v2660 = vpack.c.b16 %v2621, %v2620
        %v2661 = vpack.c.b16 %v2623, %v2622
        %v2662 = vpack.c.b16 %v2625, %v2624
        %v2663 = vpack.c.b16 %v2627, %v2626
        %v2664 = vpack.c.b16 %v2629, %v2628
        %v2665 = vpack.c.b16 %v2631, %v2630
        %v2666 = vpack.c.b16 %v2633, %v2632
        %v2667 = vpack.c.b16 %v2635, %v2634
        %2700 = vmatpush.bf16.msra.mxu0 %v2643
        %2701 = vmatpush.bf16.msra.mxu0 %v2642
        %2702 = vmatpush.bf16.msra.mxu0 %v2641
        %2703 = vmatpush.bf16.msra.mxu0 %v2640
        %2704 = vmatpush.bf16.msra.mxu0 %v2639
        %2705 = vmatpush.bf16.msra.mxu0 %v2638
        %2706 = vmatpush.bf16.msra.mxu0 %v2637
        %2707 = vmatpush.bf16.msra.mxu0 %v2636
        %2708 = vmatmul.bf16.gmra.mxu0 %v2434
        %v2709 = vpop.f32.mrf.mxu0
        %v2710 = vadd.f32 %v2506, %v2709
        %v2711 = vpop.f32.mrf.mxu0
        %2712 = vdwg.mxu0
        %2713 = vmatpush.bf16.msra.mxu0 %v2651
        %2714 = vmatpush.bf16.msra.mxu0 %v2650
        %2715 = vmatpush.bf16.msra.mxu0 %v2649
        %2716 = vmatpush.bf16.msra.mxu0 %v2648
        %2717 = vmatpush.bf16.msra.mxu0 %v2647
        %2718 = vmatpush.bf16.msra.mxu0 %v2646
        %2719 = vmatpush.bf16.msra.mxu0 %v2645
        %2720 = vmatpush.bf16.msra.mxu0 %v2644
        %2721 = vmatmul.bf16.gmra.mxu0 %v2435
        %v2722 = vpop.f32.mrf.mxu0
        %v2723 = vadd.f32 %v2710, %v2722
        %v2724 = vpop.f32.mrf.mxu0
        %2725 = vdwg.mxu0
        %2726 = vmatpush.bf16.msra.mxu0 %v2659
        %2727 = vmatpush.bf16.msra.mxu0 %v2658
        %2728 = vmatpush.bf16.msra.mxu0 %v2657
        %2729 = vmatpush.bf16.msra.mxu0 %v2656
        %2730 = vmatpush.bf16.msra.mxu0 %v2655
        %2731 = vmatpush.bf16.msra.mxu0 %v2654
        %2732 = vmatpush.bf16.msra.mxu0 %v2653
        %2733 = vmatpush.bf16.msra.mxu0 %v2652
        %2734 = vmatmul.bf16.gmra.mxu0 %v2436
        %v2735 = vpop.f32.mrf.mxu0
        %v2736 = vadd.f32 %v2723, %v2735
        %v2737 = vpop.f32.mrf.mxu0
        %2738 = vdwg.mxu0
        %2739 = vmatpush.bf16.msra.mxu0 %v2667
        %2740 = vmatpush.bf16.msra.mxu0 %v2666
        %2741 = vmatpush.bf16.msra.mxu0 %v2665
        %2742 = vmatpush.bf16.msra.mxu0 %v2664
        %2743 = vmatpush.bf16.msra.mxu0 %v2663
        %2744 = vmatpush.bf16.msra.mxu0 %v2662
        %2745 = vmatpush.bf16.msra.mxu0 %v2661
        %2746 = vmatpush.bf16.msra.mxu0 %v2660
        %2747 = vmatmul.bf16.gmra.mxu0 %v2437
        %v2748 = vpop.f32.mrf.mxu0
        %v2749 = vadd.f32 %v2736, %v2748
        %v2750 = vpop.f32.mrf.mxu0
        %2751 = vdwg.mxu0
        %v2752 = vadd.f32 %v2140, %v2749
        %2753 = vadd.xlane.f32.xlu0 %v2752
        %v2754 = vpop.xlane.xlu0 %2753
        %v2755 = vrcp.pop 128.0
        %v2756 = vmul.f32 128.0, %v2755
        %v2757 = vsub.f32 1.0, %v2756
        %v2758 = vmul.f32 %v2755, %v2757
        %v2759 = vadd.f32 %v2755, %v2758
        %vm2760 = vweird.f32 %v2755
        %v2761 = vsel %vm2760, %v2755, %v2759
        %v2762 = vmul.f32 %v2754, %v2761
        %v2763 = vsub.f32 %v2752, %v2762
        %v2764 = vmul.f32 %v2763, %v2763
        %2765 = vadd.xlane.f32.xlu0 %v2764
        %v2766 = vpop.xlane.xlu0 %2765
        %v2767 = vmul.f32 %v2766, %v2761
        %v2768 = vadd.f32 %v2767, 1e-05
        %v2769 = vrsqrt.pop %v2768
        %v2770 = vmul.f32 %v2769, %v2768
        %v2771 = vmul.f32 %v2770, %v2769
        %v2772 = vmul.f32 0.5, %v2771
        %v2773 = vsub.f32 1.5, %v2772
        %v2774 = vmul.f32 %v2769, %v2773
        %vm2775 = vweird.f32 %v2768
        %vm2776 = vweird.f32 %v2769
        %vm2777 = vmor %vm2775, %vm2776
        %v2778 = vsel %vm2777, %v2769, %v2774
        %v2779 = vmul.f32 %v2763, %v2778
        %v2780 = vld [vmem:[%s5] sm:$0x1]
        %v2782 = vperm.slane %v2780, 0
        %v2784 = vmul.f32 %v2779, %v2782
        %v2785 = vld [vmem:[%s6] sm:$0x1]
        %v2787 = vperm.slane %v2785, 0
        %v2789 = vadd.f32 %v2784, %v2787
        %v2790 = vpack.c.bf16 %v2789, %v2789
        %2791 = vst [vmem:[%s307] sm:$0xf] %v2790
        %p2792 = scmp.lt.s32.totalorder %s20, 1
        %s2793 = scalar_select %p2792, %s20, 1
        %s2794 = smul.addr %s2793, 4
        %s2795 = scalar_lea.vmem %s7, %s2794
        // Predicated region
        $region57: #{mymlp_forward.2} parent=47 // pred_check
          %p2796 = pneg %p190
        $region58: #{mymlp_forward.2} parent=47 // pred_check_branch
          %2798 = sbr.rel (%p2796) target = $region60
        $region59: #{mymlp_forward.2} parent=47 // pred_region
          _
        $region60: #{mymlp_forward.2} parent=47 // pred_fallthru
          _
      $region48: #{mymlp_forward.2} parent=5 // pred_fallthru
        _
      %p2799 = scmp.le.s32.totalorder 2, %s15
      // Predicated region
      $region61: #{mymlp_forward.2} parent=5 // pred_check
        %p2800 = pneg %p2799
      $region62: #{mymlp_forward.2} parent=5 // pred_check_branch
        %2802 = sbr.rel (%p2800) target = $region64
      $region63: #{mymlp_forward.2} parent=5 // pred_region
        %s2803 = ssub.s32 %s15, 2
        // Predicated region
        $region65: #{mymlp_forward.2} parent=63 // pred_check
          %p2804 = pneg %p196
        $region66: #{mymlp_forward.2} parent=63 // pred_check_branch
          %2806 = sbr.rel (%p2804) target = $region68
        $region67: #{mymlp_forward.2} parent=63 // pred_region
          %p2807 = scmp.lt.s32.totalorder %s21, 1
          %s2808 = scalar_select %p2807, %s21, 1
          %s2809 = smul.addr %s2808, 4
          %s2810 = scalar_lea.vmem %s7, %s2809
        $region68: #{mymlp_forward.2} parent=63 // pred_fallthru
          _
      $region64: #{mymlp_forward.2} parent=5 // pred_fallthru
        _
    $region6: #{mymlp_forward.2} parent=1 // loop_footer
      %s19 = sadd.s32 1, %s15
    $region7: #{mymlp_forward.2} parent=1 // loop_footer_branch
      %14 = sbr.rel target = $region3
    $region8: #{mymlp_forward.2} parent=1 // loop_exit
      _
    %2811 = vsyncpa [#allocation3], 1
    %s2812 = scalar_lea.sflag [#allocation3], 1
    %2813 = vsyncpa %s2812, 1
    %2814 = vsyncpa [#allocation5], 1

</llo_original>
